<compile_context>
chip_gen: v5e
topology: v5e:2x2
jax: 0.10.0
libtpu: 0.0.40
codegen_flags: <defaults>
</compile_context>

<pallas_src>
import math

import numpy as np
import jax
import jax.numpy as jnp
from jax.experimental import pallas as pl
from jax.experimental.pallas import tpu as pltpu

N_WINDOW = 5
N_HIDDEN = 16
SLAB_LANES = 128


# ----------------------------------------------------------------------------
# Parameter slab layout: each segment starts at an 8-row boundary, lane 0.
# ----------------------------------------------------------------------------
def slab_layout(feats):
    F, W = feats, N_WINDOW
    n = W * F
    FF = F * F
    FW = F * W

    def a8(v):
        return (v + 7) // 8 * 8

    off = {}
    r = 0

    def take(name, rows):
        nonlocal r
        off[name] = r
        r = a8(r + rows)

    take("wattT", W)    # (W, n)    fused attention weight, transposed
    take("battT", W)    # (W, 1)    fused attention bias (column)
    take("S", n)        # (n, W)    window selector: att -> att repeated per feature
    take("R", FF)       # (FF, n)   sum-over-window + repeat-per-head selector
    take("gcols", FF)   # (FF, 4)   per-(dst,head) columns: [cl, cr, wfc, gat_bias]
    take("WfT", FW)     # (FW, FF)  fused block-diagonal fcn weight, transposed
    take("bfT", FW)     # (FW, 1)   fused fcn bias (column)
    off["rows"] = r
    return off


def make_params(key, feats):
    """Deterministic synthetic parameters matching the module's tensor shapes."""
    W, H = N_WINDOW, N_HIDDEN
    n = W * feats
    ks = jax.random.split(key, 14)

    def u(k, shape, scale):
        return jax.random.uniform(k, shape, jnp.float32, -scale, scale)

    w1 = u(ks[0], (n, H), 1.0 / math.sqrt(n));  b1 = u(ks[1], (1, H), 1.0 / math.sqrt(n))
    w2 = u(ks[2], (H, H), 1.0 / math.sqrt(H));  b2 = u(ks[3], (1, H), 1.0 / math.sqrt(H))
    w3 = u(ks[4], (H, W), 1.0 / math.sqrt(H));  b3 = u(ks[5], (1, W), 1.0 / math.sqrt(H))
    # GATConv(1, 1, feats): fc weight (heads*out, in)=(F,1) stored as (1,F);
    # attn_l / attn_r: (1, heads, 1) stored as (1, F); bias: (heads*out,)=(F,) as (1, F).
    wfc = u(ks[6], (1, feats), 1.0)
    al = u(ks[7], (1, feats), 1.0)
    ar = u(ks[8], (1, feats), 1.0)
    gb = u(ks[9], (1, feats), 0.1)
    wf1 = u(ks[10], (feats, H), 1.0 / math.sqrt(feats)); bf1 = u(ks[11], (1, H), 1.0 / math.sqrt(feats))
    wf2 = u(ks[12], (H, W), 1.0 / math.sqrt(H));         bf2 = u(ks[13], (1, W), 1.0 / math.sqrt(H))
    return (w1, b1, w2, b2, w3, b3, wfc, al, ar, gb, wf1, bf1, wf2, bf2)


def pack_params(params, feats):
    """Pre-fuse + pack all parameters into a single (rows, 128) f32 slab."""
    (w1, b1, w2, b2, w3, b3, wfc, al, ar, gb, wf1, bf1, wf2, bf2) = [
        jnp.asarray(p, jnp.float32) for p in params]
    F, W = feats, N_WINDOW
    n = W * F
    FF = F * F
    FW = F * W
    # TODO(synk): for feats > 11 (F*F > 128) the fused fcn weight / GAT rows exceed
    # the 128-lane slab width; a head/node-tiled slab layout would be needed.
    assert FF <= SLAB_LANES and n <= SLAB_LANES and FW <= SLAB_LANES
    L = slab_layout(feats)
    slab = jnp.zeros((L["rows"], SLAB_LANES), jnp.float32)

    def put(s, r, arr):
        arr = jnp.asarray(arr, jnp.float32)
        return s.at[r:r + arr.shape[0], :arr.shape[1]].set(arr)

    # --- attention MLP fused into one affine map (LeakyReLU(True) == identity) ---
    W_att = w1 @ w2 @ w3                      # (n, W)
    b_att = (b1 @ w2 + b2) @ w3 + b3          # (1, W)
    slab = put(slab, L["wattT"], W_att.T)     # (W, n)
    slab = put(slab, L["battT"], b_att.T)     # (W, 1)

    eyeF = jnp.eye(F, dtype=jnp.float32)
    eyeW = jnp.eye(W, dtype=jnp.float32)
    onesF = jnp.ones((F, 1), jnp.float32)
    # S[w*F+f, w'] = 1 iff w == w'  (broadcast window-attention over features)
    slab = put(slab, L["S"], jnp.kron(eyeW, onesF))                    # (n, W)
    # R[v*F+h, w*F+u] = 1 iff u == v  (sum over windows, repeat per head)
    slab = put(slab, L["R"], jnp.tile(jnp.kron(eyeF, onesF), (1, W)))  # (FF, n)

    # per-(dst node, head) constants in 4 lanes: cl = wfc*attn_l, cr = wfc*attn_r, wfc, bias
    gcols = jnp.stack([jnp.tile(wfc[0] * al[0], F),
                       jnp.tile(wfc[0] * ar[0], F),
                       jnp.tile(wfc[0], F),
                       jnp.tile(gb[0], F)], axis=1)                    # (FF, 4)
    slab = put(slab, L["gcols"], gcols)

    # --- fcn's two linears fused (identity activation between them), block-diag ---
    Wfused = wf1 @ wf2                         # (F, W)
    bfused = bf1 @ wf2 + bf2                   # (1, W)
    slab = put(slab, L["WfT"], jnp.kron(eyeF, Wfused.T))               # (FW, FF)
    slab = put(slab, L["bfT"], jnp.tile(bfused[0], F)[:, None])        # (FW, 1)
    return slab


# ----------------------------------------------------------------------------
# Kernel (batch on the LANE axis: every intermediate is (rows, block_b))
# ----------------------------------------------------------------------------
def make_gdn_kernel(feats):
    F, W = feats, N_WINDOW
    n = W * F
    FF = F * F
    FW = F * W
    L = slab_layout(feats)
    f32 = jnp.float32

    def lrelu02(z):                     # GATConv's internal LeakyReLU (slope 0.2)
        return jnp.where(z >= 0, z, jnp.float32(0.2) * z)

    def kernel(xT_ref, p_ref, outT_ref):
        xT = xT_ref[...]                                               # (n, Bb)

        # -------- static slices of the resident parameter slab ----------------
        wattT = p_ref[L["wattT"]:L["wattT"] + W, 0:n]                  # (W, n)
        battT = p_ref[L["battT"]:L["battT"] + W, 0:1]                  # (W, 1)
        S = p_ref[L["S"]:L["S"] + n, 0:W]                              # (n, W)
        R = p_ref[L["R"]:L["R"] + FF, 0:n]                             # (FF, n)
        gcols = p_ref[L["gcols"]:L["gcols"] + FF, 0:4]                 # (FF, 4)
        WfT = p_ref[L["WfT"]:L["WfT"] + FW, 0:FF]                      # (FW, FF)
        bfT = p_ref[L["bfT"]:L["bfT"] + FW, 0:1]                       # (FW, 1)
        clT, crT = gcols[:, 0:1], gcols[:, 1:2]
        wfcT, gbT = gcols[:, 2:3], gcols[:, 3:4]

        # -------- fused attention affine + softmax over the window axis -------
        lg = jnp.dot(wattT, xT, preferred_element_type=f32) + battT    # (W, Bb)
        lg = lg - jnp.max(lg, axis=0, keepdims=True)
        e = jnp.exp(lg)
        att = e * pl.reciprocal(jnp.sum(e, axis=0, keepdims=True),
                                approx=False)                          # (W, Bb)

        # -------- data_r + repeat-per-head, both on the (otherwise idle) MXU --
        att_full = jnp.dot(S, att, preferred_element_type=f32)         # (n, Bb)
        dv = jnp.dot(R, xT * att_full, preferred_element_type=f32)     # (FF, Bb)
        # row v*F+h of dv holds data_r[v] (destination-node value for head h)

        # -------- GATConv(1,1,heads=F): fully connected graph + extra self loop
        er = crT * dv                                                   # er[v,h]
        # pass 1: running max over the F+1 incoming-edge scores (scores are
        # recomputed on the fly in pass 2 -> no per-edge temps kept live)
        m = lrelu02(clT * dv + er)                                      # duplicated self loop
        for u in range(F):
            du = dv[u * F:u * F + 1, :]                                 # (1, Bb) = data_r[u]
            m = jnp.maximum(m, lrelu02(clT * du + er))
        # pass 2: exp / accumulate (edge softmax, then attention-weighted mean)
        z = jnp.exp(lrelu02(clT * dv + er) - m)                         # self-loop term
        num_d = z * dv
        for u in range(F):
            du = dv[u * F:u * F + 1, :]
            p = jnp.exp(lrelu02(clT * du + er) - m)
            z = z + p
            num_d = num_d + p * du
        rst = wfcT * num_d * pl.reciprocal(z, approx=False) + gbT       # (FF, Bb)

        # -------- fused fcn (block-diag Linear(F,16) o Linear(16,5)) + sigmoid -
        yT = jnp.dot(WfT, rst, preferred_element_type=f32) + bfT        # (FW, Bb)
        outT_ref[...] = jax.nn.sigmoid(yT)                              # lane-dense store

    return kernel


# ----------------------------------------------------------------------------
# Wrapper
# ----------------------------------------------------------------------------
def gdn_forward(data_batch, slab, feats, *, block_b=512):
    """data_batch: (B, n_window*feats). Returns (B, feats*n_window)."""
    W = N_WINDOW
    B, n = data_batch.shape
    assert n == W * feats
    FW = feats * W

    B_pad = ((B + block_b - 1) // block_b) * block_b
    # Batch-on-lanes layout for the kernel (one tiny transpose pass in XLA).
    xT = data_batch.astype(jnp.float32).T                              # (n, B)
    if B_pad != B:
        xT = jnp.pad(xT, ((0, 0), (0, B_pad - B)))

    rows = slab.shape[0]
    kernel = make_gdn_kernel(feats)

    outT = pl.pallas_call(
        kernel,
        out_shape=jax.ShapeDtypeStruct((FW, B_pad), jnp.float32),
        grid_spec=pltpu.PrefetchScalarGridSpec(
            num_scalar_prefetch=0,
            grid=(B_pad // block_b,),                                   # keep >= 2 for v7x
            in_specs=[
                pl.BlockSpec((n, block_b), lambda i: (0, i)),           # batch of windows (T)
                pl.BlockSpec((rows, SLAB_LANES), lambda i: (0, 0)),     # resident param slab
            ],
            out_specs=pl.BlockSpec((FW, block_b), lambda i: (0, i)),    # transposed output
        ),
        compiler_params=pltpu.CompilerParams(
            dimension_semantics=("parallel",)),                         # 2 TCs on v7x
    )(xT, slab)
    return outT[:, :B].T


# ----------------------------------------------------------------------------
# Pure numpy reference (single window, unfused, float64) for correctness checks.
# ----------------------------------------------------------------------------
def gdn_reference(data, params, feats):
    W = N_WINDOW
    (w1, b1, w2, b2, w3, b3, wfc, al, ar, gb, wf1, bf1, wf2, bf2) = [
        np.asarray(t, dtype=np.float64) for t in params]
    d = np.asarray(data, dtype=np.float64)

    x = d.reshape(1, -1)
    h = x @ w1 + b1            # LeakyReLU(True) == identity
    h = h @ w2 + b2
    logits = (h @ w3 + b3)[0]
    e = np.exp(logits - logits.max())
    att = e / e.sum()                                   # (W,)

    dwin = d.reshape(W, feats)
    data_r = dwin.T @ att                               # (F,)

    feat = data_r[:, None] * wfc[0][None, :]            # (F nodes, F heads)
    el = feat * al[0][None, :]
    er = feat * ar[0][None, :]
    lrelu = lambda v: np.where(v >= 0, v, 0.2 * v)
    e3 = lrelu(el[None, :, :] + er[:, None, :])         # (v, u, h)
    s_self = lrelu(el + er)                             # duplicated self loop
    m = e3.max(axis=1, keepdims=True)
    p = np.exp(e3 - m)
    p_self = np.exp(s_self - m[:, 0, :])
    z = p.sum(axis=1) + p_self
    num = (p * feat[None, :, :]).sum(axis=1) + p_self * feat
    rst = num / z + gb[0][None, :]

    y = rst @ wf1 + bf1        # LeakyReLU(True) == identity
    y = y @ wf2 + bf2
    return (1.0 / (1.0 + np.exp(-y))).reshape(-1)


if __name__ == "__main__":
    feats = 4                      # n_feats; n_window = 5 -> per-window input length 20
    B = 1024                       # batch of independent windows
    block_b = 512                  # 2 grid steps -> both v7x TensorCores get work
    key = jax.random.PRNGKey(0)
    k_data, k_param = jax.random.split(key)

    params = make_params(k_param, feats)
    slab = pack_params(params, feats)                  # fused + packed once; one DMA per call
    data = jax.random.normal(k_data, (B, N_WINDOW * feats), jnp.float32)

    out = gdn_forward(data, slab, feats, block_b=block_b)
    out = jax.block_until_ready(out)
    assert out.shape == (B, feats * N_WINDOW), out.shape

    out_np = np.asarray(out)
    data_np = np.asarray(data)
    max_err = 0.0
    for b in range(B):
        ref = gdn_reference(data_np[b], params, feats)
        max_err = max(max_err, float(np.max(np.abs(out_np[b] - ref))))
    if max_err > 1e-3:
        raise AssertionError(f"Pallas kernel mismatch vs reference: max abs err = {max_err}")
    print("KERNEL_OK")
</pallas_src>

<mosaic_0001>
module attributes {stable_mosaic.version = 11 : i64} {
  func.func @kernel(%arg0: i32, %arg1: memref<20x512xf32, #tpu.memory_space<vmem>>, %arg2: memref<120x128xf32, #tpu.memory_space<vmem>>, %arg3: memref<20x512xf32, #tpu.memory_space<vmem>>) attributes {dimension_semantics = [#tpu.dimension_semantics<parallel>], iteration_bounds = array<i64: 2>, scalar_prefetch = 0 : i64, scratch_operands = 0 : i64, tpu.core_type = #tpu.core_type<tc>, window_params = [{transform_indices = @transform_0, window_bounds = array<i64: 20, 512>}, {pipeline_mode = #tpu.pipeline_mode<synchronous>, transform_indices = @transform_1, window_bounds = array<i64: 120, 128>}, {transform_indices = @transform_2, window_bounds = array<i64: 20, 512>}]} {
    %c0 = arith.constant 0 : index
    %c0_0 = arith.constant 0 : index
    %0 = vector.load %arg1[%c0, %c0_0] : memref<20x512xf32, #tpu.memory_space<vmem>>, vector<20x512xf32>
    %c0_1 = arith.constant 0 : index
    %c0_2 = arith.constant 0 : index
    %1 = vector.load %arg2[%c0_1, %c0_2] : memref<120x128xf32, #tpu.memory_space<vmem>>, vector<5x20xf32>
    %c8 = arith.constant 8 : index
    %c0_3 = arith.constant 0 : index
    %2 = vector.load %arg2[%c8, %c0_3] : memref<120x128xf32, #tpu.memory_space<vmem>>, vector<5x1xf32>
    %c16 = arith.constant 16 : index
    %c0_4 = arith.constant 0 : index
    %3 = vector.load %arg2[%c16, %c0_4] : memref<120x128xf32, #tpu.memory_space<vmem>>, vector<20x5xf32>
    %c40 = arith.constant 40 : index
    %c0_5 = arith.constant 0 : index
    %4 = vector.load %arg2[%c40, %c0_5] : memref<120x128xf32, #tpu.memory_space<vmem>>, vector<16x20xf32>
    %c56 = arith.constant 56 : index
    %c0_6 = arith.constant 0 : index
    %5 = vector.load %arg2[%c56, %c0_6] : memref<120x128xf32, #tpu.memory_space<vmem>>, vector<16x4xf32>
    %c72 = arith.constant 72 : index
    %c0_7 = arith.constant 0 : index
    %6 = vector.load %arg2[%c72, %c0_7] : memref<120x128xf32, #tpu.memory_space<vmem>>, vector<20x16xf32>
    %c96 = arith.constant 96 : index
    %c0_8 = arith.constant 0 : index
    %7 = vector.load %arg2[%c96, %c0_8] : memref<120x128xf32, #tpu.memory_space<vmem>>, vector<20x1xf32>
    %8 = vector.extract_strided_slice %5 {offsets = [0, 0], sizes = [16, 1], strides = [1, 1]} : vector<16x4xf32> to vector<16x1xf32>
    %9 = vector.extract_strided_slice %5 {offsets = [0, 1], sizes = [16, 1], strides = [1, 1]} : vector<16x4xf32> to vector<16x1xf32>
    %10 = vector.extract_strided_slice %5 {offsets = [0, 2], sizes = [16, 1], strides = [1, 1]} : vector<16x4xf32> to vector<16x1xf32>
    %11 = vector.extract_strided_slice %5 {offsets = [0, 3], sizes = [16, 1], strides = [1, 1]} : vector<16x4xf32> to vector<16x1xf32>
    %cst = arith.constant dense<0.000000e+00> : vector<5x512xf32>
    %12 = tpu.matmul %1, %0, %cst {dimension_numbers = #tpu.dot_dimension_numbers<[1], [0], [0], [1], [0, 0, 1, 1], [], []>} : vector<5x20xf32>, vector<20x512xf32>, vector<5x512xf32> -> vector<5x512xf32>
    %13 = vector.broadcast %2 : vector<5x1xf32> to vector<5x512xf32>
    %14 = arith.addf %12, %13 : vector<5x512xf32>
    %cst_9 = arith.constant dense<0xFF800000> : vector<512xf32>
    %15 = vector.multi_reduction <maximumf>, %14, %cst_9 [0] : vector<5x512xf32> to vector<512xf32>
    %16 = vector.shape_cast %15 : vector<512xf32> to vector<1x512xf32>
    %17 = vector.broadcast %16 : vector<1x512xf32> to vector<5x512xf32>
    %18 = arith.subf %14, %17 : vector<5x512xf32>
    %19 = math.exp %18 : vector<5x512xf32>
    %cst_10 = arith.constant dense<0.000000e+00> : vector<512xf32>
    %20 = vector.multi_reduction <add>, %19, %cst_10 [0] : vector<5x512xf32> to vector<512xf32>
    %21 = vector.shape_cast %20 : vector<512xf32> to vector<1x512xf32>
    %22 = tpu.reciprocal %21 : vector<1x512xf32> -> vector<1x512xf32>
    %23 = vector.broadcast %22 : vector<1x512xf32> to vector<5x512xf32>
    %24 = arith.mulf %19, %23 : vector<5x512xf32>
    %cst_11 = arith.constant dense<0.000000e+00> : vector<20x512xf32>
    %25 = tpu.matmul %3, %24, %cst_11 {dimension_numbers = #tpu.dot_dimension_numbers<[1], [0], [0], [1], [0, 0, 1, 1], [], []>} : vector<20x5xf32>, vector<5x512xf32>, vector<20x512xf32> -> vector<20x512xf32>
    %26 = arith.mulf %0, %25 : vector<20x512xf32>
    %cst_12 = arith.constant dense<0.000000e+00> : vector<16x512xf32>
    %27 = tpu.matmul %4, %26, %cst_12 {dimension_numbers = #tpu.dot_dimension_numbers<[1], [0], [0], [1], [0, 0, 1, 1], [], []>} : vector<16x20xf32>, vector<20x512xf32>, vector<16x512xf32> -> vector<16x512xf32>
    %28 = vector.broadcast %9 : vector<16x1xf32> to vector<16x512xf32>
    %29 = arith.mulf %28, %27 : vector<16x512xf32>
    %30 = vector.broadcast %8 : vector<16x1xf32> to vector<16x512xf32>
    %31 = arith.mulf %30, %27 : vector<16x512xf32>
    %32 = arith.addf %31, %29 : vector<16x512xf32>
    %cst_13 = arith.constant 0.000000e+00 : f32
    %33 = vector.broadcast %cst_13 : f32 to vector<16x512xf32>
    %34 = arith.cmpf oge, %32, %33 : vector<16x512xf32>
    %cst_14 = arith.constant 2.000000e-01 : f32
    %35 = vector.broadcast %cst_14 : f32 to vector<16x512xf32>
    %36 = arith.mulf %35, %32 : vector<16x512xf32>
    %37 = arith.select %34, %32, %36 : vector<16x512xi1>, vector<16x512xf32>
    %38 = vector.extract_strided_slice %27 {offsets = [0, 0], sizes = [1, 512], strides = [1, 1]} : vector<16x512xf32> to vector<1x512xf32>
    %39 = vector.broadcast %8 : vector<16x1xf32> to vector<16x512xf32>
    %40 = vector.broadcast %38 : vector<1x512xf32> to vector<16x512xf32>
    %41 = arith.mulf %39, %40 : vector<16x512xf32>
    %42 = arith.addf %41, %29 : vector<16x512xf32>
    %cst_15 = arith.constant 0.000000e+00 : f32
    %43 = vector.broadcast %cst_15 : f32 to vector<16x512xf32>
    %44 = arith.cmpf oge, %42, %43 : vector<16x512xf32>
    %cst_16 = arith.constant 2.000000e-01 : f32
    %45 = vector.broadcast %cst_16 : f32 to vector<16x512xf32>
    %46 = arith.mulf %45, %42 : vector<16x512xf32>
    %47 = arith.select %44, %42, %46 : vector<16x512xi1>, vector<16x512xf32>
    %48 = arith.maximumf %37, %47 : vector<16x512xf32>
    %49 = vector.extract_strided_slice %27 {offsets = [4, 0], sizes = [1, 512], strides = [1, 1]} : vector<16x512xf32> to vector<1x512xf32>
    %50 = vector.broadcast %8 : vector<16x1xf32> to vector<16x512xf32>
    %51 = vector.broadcast %49 : vector<1x512xf32> to vector<16x512xf32>
    %52 = arith.mulf %50, %51 : vector<16x512xf32>
    %53 = arith.addf %52, %29 : vector<16x512xf32>
    %cst_17 = arith.constant 0.000000e+00 : f32
    %54 = vector.broadcast %cst_17 : f32 to vector<16x512xf32>
    %55 = arith.cmpf oge, %53, %54 : vector<16x512xf32>
    %cst_18 = arith.constant 2.000000e-01 : f32
    %56 = vector.broadcast %cst_18 : f32 to vector<16x512xf32>
    %57 = arith.mulf %56, %53 : vector<16x512xf32>
    %58 = arith.select %55, %53, %57 : vector<16x512xi1>, vector<16x512xf32>
    %59 = arith.maximumf %48, %58 : vector<16x512xf32>
    %60 = vector.extract_strided_slice %27 {offsets = [8, 0], sizes = [1, 512], strides = [1, 1]} : vector<16x512xf32> to vector<1x512xf32>
    %61 = vector.broadcast %8 : vector<16x1xf32> to vector<16x512xf32>
    %62 = vector.broadcast %60 : vector<1x512xf32> to vector<16x512xf32>
    %63 = arith.mulf %61, %62 : vector<16x512xf32>
    %64 = arith.addf %63, %29 : vector<16x512xf32>
    %cst_19 = arith.constant 0.000000e+00 : f32
    %65 = vector.broadcast %cst_19 : f32 to vector<16x512xf32>
    %66 = arith.cmpf oge, %64, %65 : vector<16x512xf32>
    %cst_20 = arith.constant 2.000000e-01 : f32
    %67 = vector.broadcast %cst_20 : f32 to vector<16x512xf32>
    %68 = arith.mulf %67, %64 : vector<16x512xf32>
    %69 = arith.select %66, %64, %68 : vector<16x512xi1>, vector<16x512xf32>
    %70 = arith.maximumf %59, %69 : vector<16x512xf32>
    %71 = vector.extract_strided_slice %27 {offsets = [12, 0], sizes = [1, 512], strides = [1, 1]} : vector<16x512xf32> to vector<1x512xf32>
    %72 = vector.broadcast %8 : vector<16x1xf32> to vector<16x512xf32>
    %73 = vector.broadcast %71 : vector<1x512xf32> to vector<16x512xf32>
    %74 = arith.mulf %72, %73 : vector<16x512xf32>
    %75 = arith.addf %74, %29 : vector<16x512xf32>
    %cst_21 = arith.constant 0.000000e+00 : f32
    %76 = vector.broadcast %cst_21 : f32 to vector<16x512xf32>
    %77 = arith.cmpf oge, %75, %76 : vector<16x512xf32>
    %cst_22 = arith.constant 2.000000e-01 : f32
    %78 = vector.broadcast %cst_22 : f32 to vector<16x512xf32>
    %79 = arith.mulf %78, %75 : vector<16x512xf32>
    %80 = arith.select %77, %75, %79 : vector<16x512xi1>, vector<16x512xf32>
    %81 = arith.maximumf %70, %80 : vector<16x512xf32>
    %82 = vector.broadcast %8 : vector<16x1xf32> to vector<16x512xf32>
    %83 = arith.mulf %82, %27 : vector<16x512xf32>
    %84 = arith.addf %83, %29 : vector<16x512xf32>
    %cst_23 = arith.constant 0.000000e+00 : f32
    %85 = vector.broadcast %cst_23 : f32 to vector<16x512xf32>
    %86 = arith.cmpf oge, %84, %85 : vector<16x512xf32>
    %cst_24 = arith.constant 2.000000e-01 : f32
    %87 = vector.broadcast %cst_24 : f32 to vector<16x512xf32>
    %88 = arith.mulf %87, %84 : vector<16x512xf32>
    %89 = arith.select %86, %84, %88 : vector<16x512xi1>, vector<16x512xf32>
    %90 = arith.subf %89, %81 : vector<16x512xf32>
    %91 = math.exp %90 : vector<16x512xf32>
    %92 = arith.mulf %91, %27 : vector<16x512xf32>
    %93 = vector.extract_strided_slice %27 {offsets = [0, 0], sizes = [1, 512], strides = [1, 1]} : vector<16x512xf32> to vector<1x512xf32>
    %94 = vector.broadcast %8 : vector<16x1xf32> to vector<16x512xf32>
    %95 = vector.broadcast %93 : vector<1x512xf32> to vector<16x512xf32>
    %96 = arith.mulf %94, %95 : vector<16x512xf32>
    %97 = arith.addf %96, %29 : vector<16x512xf32>
    %cst_25 = arith.constant 0.000000e+00 : f32
    %98 = vector.broadcast %cst_25 : f32 to vector<16x512xf32>
    %99 = arith.cmpf oge, %97, %98 : vector<16x512xf32>
    %cst_26 = arith.constant 2.000000e-01 : f32
    %100 = vector.broadcast %cst_26 : f32 to vector<16x512xf32>
    %101 = arith.mulf %100, %97 : vector<16x512xf32>
    %102 = arith.select %99, %97, %101 : vector<16x512xi1>, vector<16x512xf32>
    %103 = arith.subf %102, %81 : vector<16x512xf32>
    %104 = math.exp %103 : vector<16x512xf32>
    %105 = arith.addf %91, %104 : vector<16x512xf32>
    %106 = vector.broadcast %93 : vector<1x512xf32> to vector<16x512xf32>
    %107 = arith.mulf %104, %106 : vector<16x512xf32>
    %108 = arith.addf %92, %107 : vector<16x512xf32>
    %109 = vector.extract_strided_slice %27 {offsets = [4, 0], sizes = [1, 512], strides = [1, 1]} : vector<16x512xf32> to vector<1x512xf32>
    %110 = vector.broadcast %8 : vector<16x1xf32> to vector<16x512xf32>
    %111 = vector.broadcast %109 : vector<1x512xf32> to vector<16x512xf32>
    %112 = arith.mulf %110, %111 : vector<16x512xf32>
    %113 = arith.addf %112, %29 : vector<16x512xf32>
    %cst_27 = arith.constant 0.000000e+00 : f32
    %114 = vector.broadcast %cst_27 : f32 to vector<16x512xf32>
    %115 = arith.cmpf oge, %113, %114 : vector<16x512xf32>
    %cst_28 = arith.constant 2.000000e-01 : f32
    %116 = vector.broadcast %cst_28 : f32 to vector<16x512xf32>
    %117 = arith.mulf %116, %113 : vector<16x512xf32>
    %118 = arith.select %115, %113, %117 : vector<16x512xi1>, vector<16x512xf32>
    %119 = arith.subf %118, %81 : vector<16x512xf32>
    %120 = math.exp %119 : vector<16x512xf32>
    %121 = arith.addf %105, %120 : vector<16x512xf32>
    %122 = vector.broadcast %109 : vector<1x512xf32> to vector<16x512xf32>
    %123 = arith.mulf %120, %122 : vector<16x512xf32>
    %124 = arith.addf %108, %123 : vector<16x512xf32>
    %125 = vector.extract_strided_slice %27 {offsets = [8, 0], sizes = [1, 512], strides = [1, 1]} : vector<16x512xf32> to vector<1x512xf32>
    %126 = vector.broadcast %8 : vector<16x1xf32> to vector<16x512xf32>
    %127 = vector.broadcast %125 : vector<1x512xf32> to vector<16x512xf32>
    %128 = arith.mulf %126, %127 : vector<16x512xf32>
    %129 = arith.addf %128, %29 : vector<16x512xf32>
    %cst_29 = arith.constant 0.000000e+00 : f32
    %130 = vector.broadcast %cst_29 : f32 to vector<16x512xf32>
    %131 = arith.cmpf oge, %129, %130 : vector<16x512xf32>
    %cst_30 = arith.constant 2.000000e-01 : f32
    %132 = vector.broadcast %cst_30 : f32 to vector<16x512xf32>
    %133 = arith.mulf %132, %129 : vector<16x512xf32>
    %134 = arith.select %131, %129, %133 : vector<16x512xi1>, vector<16x512xf32>
    %135 = arith.subf %134, %81 : vector<16x512xf32>
    %136 = math.exp %135 : vector<16x512xf32>
    %137 = arith.addf %121, %136 : vector<16x512xf32>
    %138 = vector.broadcast %125 : vector<1x512xf32> to vector<16x512xf32>
    %139 = arith.mulf %136, %138 : vector<16x512xf32>
    %140 = arith.addf %124, %139 : vector<16x512xf32>
    %141 = vector.extract_strided_slice %27 {offsets = [12, 0], sizes = [1, 512], strides = [1, 1]} : vector<16x512xf32> to vector<1x512xf32>
    %142 = vector.broadcast %8 : vector<16x1xf32> to vector<16x512xf32>
    %143 = vector.broadcast %141 : vector<1x512xf32> to vector<16x512xf32>
    %144 = arith.mulf %142, %143 : vector<16x512xf32>
    %145 = arith.addf %144, %29 : vector<16x512xf32>
    %cst_31 = arith.constant 0.000000e+00 : f32
    %146 = vector.broadcast %cst_31 : f32 to vector<16x512xf32>
    %147 = arith.cmpf oge, %145, %146 : vector<16x512xf32>
    %cst_32 = arith.constant 2.000000e-01 : f32
    %148 = vector.broadcast %cst_32 : f32 to vector<16x512xf32>
    %149 = arith.mulf %148, %145 : vector<16x512xf32>
    %150 = arith.select %147, %145, %149 : vector<16x512xi1>, vector<16x512xf32>
    %151 = arith.subf %150, %81 : vector<16x512xf32>
    %152 = math.exp %151 : vector<16x512xf32>
    %153 = arith.addf %137, %152 : vector<16x512xf32>
    %154 = vector.broadcast %141 : vector<1x512xf32> to vector<16x512xf32>
    %155 = arith.mulf %152, %154 : vector<16x512xf32>
    %156 = arith.addf %140, %155 : vector<16x512xf32>
    %157 = vector.broadcast %10 : vector<16x1xf32> to vector<16x512xf32>
    %158 = arith.mulf %157, %156 : vector<16x512xf32>
    %159 = tpu.reciprocal %153 : vector<16x512xf32> -> vector<16x512xf32>
    %160 = arith.mulf %158, %159 : vector<16x512xf32>
    %161 = vector.broadcast %11 : vector<16x1xf32> to vector<16x512xf32>
    %162 = arith.addf %160, %161 : vector<16x512xf32>
    %cst_33 = arith.constant dense<0.000000e+00> : vector<20x512xf32>
    %163 = tpu.matmul %6, %162, %cst_33 {dimension_numbers = #tpu.dot_dimension_numbers<[1], [0], [0], [1], [0, 0, 1, 1], [], []>} : vector<20x16xf32>, vector<16x512xf32>, vector<20x512xf32> -> vector<20x512xf32>
    %164 = vector.broadcast %7 : vector<20x1xf32> to vector<20x512xf32>
    %165 = arith.addf %163, %164 : vector<20x512xf32>
    %166 = arith.negf %165 : vector<20x512xf32>
    %167 = math.exp %166 : vector<20x512xf32>
    %cst_34 = arith.constant 1.000000e+00 : f32
    %168 = vector.broadcast %cst_34 : f32 to vector<20x512xf32>
    %169 = arith.addf %168, %167 : vector<20x512xf32>
    %170 = arith.divf %168, %169 : vector<20x512xf32>
    %c0_35 = arith.constant 0 : index
    %c0_36 = arith.constant 0 : index
    %171 = vector.load %arg3[%c0_35, %c0_36] : memref<20x512xf32, #tpu.memory_space<vmem>>, vector<20x512xf32>
    tpu.vector_store %arg3[%c0_35, %c0_36], %170 {strides = array<i32>} : memref<20x512xf32, #tpu.memory_space<vmem>>, vector<20x512xf32>,
    return
  }
  func.func @transform_0(%arg0: i32) -> (i32, i32) {
    %c0_i32 = arith.constant 0 : i32
    %c0_i32_0 = arith.constant 0 : i32
    return %c0_i32, %arg0 : i32, i32
  }
  func.func @transform_1(%arg0: i32) -> (i32, i32) {
    %c0_i32 = arith.constant 0 : i32
    %c0_i32_0 = arith.constant 0 : i32
    %c0_i32_1 = arith.constant 0 : i32
    return %c0_i32, %c0_i32_0 : i32, i32
  }
  func.func @transform_2(%arg0: i32) -> (i32, i32) {
    %c0_i32 = arith.constant 0 : i32
    %c0_i32_0 = arith.constant 0 : i32
    return %c0_i32, %arg0 : i32, i32
  }
}

</mosaic_0001>

<llo_original>
// kernel: tpu_custom_call.1
$region0: #{tpu_custom_call.1}
  #allocation0 [shape = 'u32[]', space=smem, size = 0x4, offset = 0x4, fixed_abs, tag = 'smem constant byte address 0x4 - core index']
  #allocation1 [shape = 'u32[72,128]{1,0:T(1,128)}', space=vmem, size = 0x9000, scoped, tag = 'internal scratch']
  %s0 = inlined_call_operand.hbm [shape: f32[20,1024], index: 0, kind: input, shape index: {}]
  %s1 = inlined_call_operand.hbm [shape: f32[120,128], index: 1, kind: input, shape index: {}]
  %s2 = inlined_call_operand.hbm [shape: f32[20,1024], index: 2, kind: output, shape index: {}]
  %s3 = sld [smem:[#allocation0]]
  $region49: #{tpu_custom_call.1} parent=0
    _
  %s5 = ssub.s32 1, %s3
  %s6 = scalar_select 0, %s5, %s3
  $region1: #{tpu_custom_call.1} parent=0
    #allocation2 [shape = 'u8[98304]{0}', space=vmem, size = 0x18000, scoped, tag = 'input window, operand 0']
    #allocation3 [shape = 's32[2]{0}', space=sflag, size = 0x8, scoped, tag = 'scoped memory for tpu_custom_call.1']
    #allocation4 [shape = 's32[2]{0}', space=sflag, size = 0x8, scoped, tag = 'scoped memory for tpu_custom_call.1']
    #allocation5 [shape = 'u8[61440]{0}', space=vmem, size = 0xf000, scoped, tag = 'input window, operand 1, single buffered']
    #allocation6 [shape = 's32[1]{0}', space=sflag, size = 0x4, scoped, tag = 'scoped memory for tpu_custom_call.1']
    #allocation7 [shape = 'u8[98304]{0}', space=vmem, size = 0x18000, scoped, tag = 'output window, operand 0']
    %7 = vsyncpa [#allocation3], 0
    %s8 = scalar_lea.sflag [#allocation3], 1
    %9 = vsyncpa %s8, 0
    %10 = vsyncpa [#allocation6], 0
    %11 = vsyncpa [#allocation4], 0
    %s12 = scalar_lea.sflag [#allocation4], 1
    %13 = vsyncpa %s12, 0
    loop: start=0, step=1, limit=4
    $region2: #{tpu_custom_call.1} parent=1 // loop_pre_header
      _
    $region3: #{tpu_custom_call.1} parent=1 // loop_header
      %s15 = sphi 0, %s19
      %p16 = scmp.ge.s32.totalorder %s15, 4
      %s25 = sphi 0, %s27
      %s28 = sphi 0, %s25
      %s29 = sphi 0, %s28
      %s45 = sphi 0, %s29
      %s49 = sphi 0, %s49
      %s51 = sphi 0, %s49
      %s52 = sphi 0, %s51
      %s66 = sphi 0, %s52
      %s72 = sphi 0, %s74
      %s75 = sphi 0, %s72
      %s76 = sphi 0, %s75
      %s92 = sphi 0, %s76
    $region4: #{tpu_custom_call.1} parent=1 // loop_header_branch
      %18 = sbr.rel (%p16) target = $region8
    $region5: #{tpu_custom_call.1} parent=1 // loop_body
      %s20 = ssub.s32 %s15, 1
      %s21 = ssub.s32 %s15, 2
      %s22 = sadd.s32 %s15, 1
      %s23 = ssub.s32 %s15, %s22
      %p24 = scmp.eq.s32.totalorder %s23, 0
      %s26 = sadd.s32 %s25, 1
      %s27 = scalar_select %p24, %s25, %s26
      %p30 = pneg %p24
      %p31 = scmp.eq.s32.totalorder %s15, 1
      %p32 = por %p30, %p31
      %p33 = scmp.ne.s32.totalorder %s25, %s28
      %p34 = scmp.eq.s32.totalorder %s15, 0
      %p35 = por %p33, %p34
      %p36 = scmp.ne.s32.totalorder %s25, %s28
      %p37 = scmp.eq.s32.totalorder %s20, 1
      %p38 = por %p36, %p37
      %p39 = scmp.ne.s32.totalorder %s28, %s29
      %p40 = scmp.eq.s32.totalorder %s20, 0
      %p41 = por %p39, %p40
      %p42 = scmp.ne.s32.totalorder %s28, %s29
      %p43 = scmp.eq.s32.totalorder %s21, 1
      %p44 = por %p42, %p43
      %p46 = scmp.ne.s32.totalorder %s29, %s45
      %p47 = scmp.eq.s32.totalorder %s21, 0
      %p48 = por %p46, %p47
      %s50 = sadd.s32 %s49, 1
      %p53 = scmp.eq.s32.totalorder %s15, 1
      %p54 = scmp.ne.s32.totalorder %s49, %s51
      %p55 = scmp.eq.s32.totalorder %s15, 0
      %p56 = por %p54, %p55
      %p57 = scmp.ne.s32.totalorder %s49, %s51
      %p58 = scmp.eq.s32.totalorder %s20, 1
      %p59 = por %p57, %p58
      %p60 = scmp.ne.s32.totalorder %s51, %s52
      %p61 = scmp.eq.s32.totalorder %s20, 0
      %p62 = por %p60, %p61
      %p63 = scmp.ne.s32.totalorder %s51, %s52
      %p64 = scmp.eq.s32.totalorder %s21, 1
      %p65 = por %p63, %p64
      %p67 = scmp.ne.s32.totalorder %s52, %s66
      %p68 = scmp.eq.s32.totalorder %s21, 0
      %p69 = por %p67, %p68
      %s70 = ssub.s32 %s15, %s22
      %p71 = scmp.eq.s32.totalorder %s70, 0
      %s73 = sadd.s32 %s72, 1
      %s74 = scalar_select %p71, %s72, %s73
      %p77 = pneg %p71
      %p78 = scmp.eq.s32.totalorder %s15, 1
      %p79 = por %p77, %p78
      %p80 = scmp.ne.s32.totalorder %s72, %s75
      %p81 = scmp.eq.s32.totalorder %s15, 0
      %p82 = por %p80, %p81
      %p83 = scmp.ne.s32.totalorder %s72, %s75
      %p84 = scmp.eq.s32.totalorder %s20, 1
      %p85 = por %p83, %p84
      %p86 = scmp.ne.s32.totalorder %s75, %s76
      %p87 = scmp.eq.s32.totalorder %s20, 0
      %p88 = por %p86, %p87
      %p89 = scmp.ne.s32.totalorder %s75, %s76
      %p90 = scmp.eq.s32.totalorder %s21, 1
      %p91 = por %p89, %p90
      %p93 = scmp.ne.s32.totalorder %s76, %s92
      %p94 = scmp.eq.s32.totalorder %s21, 0
      %p95 = por %p93, %p94
      %p96 = scmp.le.s32.totalorder 1, %s15
      %p97 = scmp.lt.s32.totalorder %s15, 3
      %p98 = pnand %p96, %p97
      %p99 = pneg %p98
      // Predicated region
      $region9: #{tpu_custom_call.1} parent=5 // pred_check
        _
      $region10: #{tpu_custom_call.1} parent=5 // pred_check_branch
        %101 = sbr.rel (%p98) target = $region12
      $region11: #{tpu_custom_call.1} parent=5 // pred_region
        %s102 = ssub.s32 %s15, 1
        // Predicated region
        $region13: #{tpu_custom_call.1} parent=11 // pred_check
          %p103 = pneg %p62
        $region14: #{tpu_custom_call.1} parent=11 // pred_check_branch
          %105 = sbr.rel (%p103) target = $region16
        $region15: #{tpu_custom_call.1} parent=11 // pred_region
          %107 = vsyncadd [#allocation6], 0
          %s108 = sshll.u32 %s1, 4
          %s109 = int_to_ptr.hbm [resolvable:$true] %s108
          %s110 = sshll.u32 [#allocation5], 4
          %s111 = int_to_ptr.vmem [resolvable:$true] %s110
          %116 = dma.hbm_to_vmem [thread:$0]  %s109, 1920, %s111, [#allocation6], 128, 128, 8
        $region16: #{tpu_custom_call.1} parent=11 // pred_fallthru
          _
      $region12: #{tpu_custom_call.1} parent=5 // pred_fallthru
        _
      %p117 = scmp.lt.s32.totalorder %s15, 2
      // Predicated region
      $region17: #{tpu_custom_call.1} parent=5 // pred_check
        %p118 = pneg %p117
      $region18: #{tpu_custom_call.1} parent=5 // pred_check_branch
        %120 = sbr.rel (%p118) target = $region20
      $region19: #{tpu_custom_call.1} parent=5 // pred_region
        // Predicated region
        $region21: #{tpu_custom_call.1} parent=19 // pred_check
          %p121 = pneg %p35
        $region22: #{tpu_custom_call.1} parent=19 // pred_check_branch
          %123 = sbr.rel (%p121) target = $region24
        $region23: #{tpu_custom_call.1} parent=19 // pred_region
          %s124 = sand.u32 %s25, 1
          %s125 = scalar_lea.sflag [#allocation3], %s124
          %s126 = sand.u32 %s25, 1
          %s127 = smul.addr %s126, 96
          %s128 = scalar_lea.vmem [#allocation2], %s127
          %s129 = smul.u32 4, %s15
          %131 = vsyncadd %s125, 0
          %s132 = smul.addr %s129, 8
          %s133 = scalar_lea.hbm %s0, %s132
          %s134 = sshll.u32 %s133, 4
          %s135 = int_to_ptr.hbm [resolvable:$true] %s134
          %s136 = sshll.u32 %s128, 4
          %s137 = int_to_ptr.vmem [resolvable:$true] %s136
          %142 = dma.hbm_to_vmem [thread:$0]  %s135, 1536, %s137, %s125, 1024, 512, 32
        $region24: #{tpu_custom_call.1} parent=19 // pred_fallthru
          _
      $region20: #{tpu_custom_call.1} parent=5 // pred_fallthru
        _
      %p143 = scmp.le.s32.totalorder 1, %s15
      %p144 = scmp.lt.s32.totalorder %s15, 3
      %p145 = pnand %p143, %p144
      %p146 = pneg %p145
      // Predicated region
      $region25: #{tpu_custom_call.1} parent=5 // pred_check
        _
      $region26: #{tpu_custom_call.1} parent=5 // pred_check_branch
        %148 = sbr.rel (%p145) target = $region28
      $region27: #{tpu_custom_call.1} parent=5 // pred_region
        %s149 = ssub.s32 %s15, 1
        %s150 = sand.u32 %s28, 1
        %s151 = scalar_lea.sflag [#allocation3], %s150
        %s152 = sand.u32 %s28, 1
        %s153 = smul.addr %s152, 96
        %s154 = scalar_lea.vmem [#allocation2], %s153
        // Predicated region
        $region29: #{tpu_custom_call.1} parent=27 // pred_check
          %p155 = pneg %p41
        $region30: #{tpu_custom_call.1} parent=27 // pred_check_branch
          %157 = sbr.rel (%p155) target = $region32
        $region31: #{tpu_custom_call.1} parent=27 // pred_region
          %159 = dma.done %s151, 1536
        $region32: #{tpu_custom_call.1} parent=27 // pred_fallthru
          _
        // Predicated region
        $region33: #{tpu_custom_call.1} parent=27 // pred_check
          %p160 = pneg %p62
        $region34: #{tpu_custom_call.1} parent=27 // pred_check_branch
          %162 = sbr.rel (%p160) target = $region36
        $region35: #{tpu_custom_call.1} parent=27 // pred_region
          %164 = dma.done [#allocation6], 1920
        $region36: #{tpu_custom_call.1} parent=27 // pred_fallthru
          _
        %s165 = sand.u32 %s28, 1
        %s166 = scalar_lea.sflag [#allocation3], %s165
        %s167 = sand.u32 %s28, 1
        %s168 = smul.addr %s167, 96
        %s169 = scalar_lea.vmem [#allocation2], %s168
        %p170 = pneg %p41
        %p171 = pneg %p38
        %p172 = pneg %p62
        %p173 = pneg %p59
        %p174 = pneg %p88
        %p175 = pneg %p85
        %s176 = sand.u32 %s75, 1
        %s177 = scalar_lea.sflag [#allocation4], %s176
        %s178 = sand.u32 %s75, 1
        %s179 = smul.addr %s178, 96
        %s180 = scalar_lea.vmem [#allocation7], %s179
        %s181 = smul.u32 4, %s20
        %s182 = smul.u32 4, %s20
        %v183 = vld [vmem:[%s154] sm:$0xff]
        %v184 = vld [vmem:[%s154 + $0x8] sm:$0xff]
        %v185 = vld [vmem:[%s154 + $0x10] sm:$0xff]
        %v186 = vld [vmem:[%s154 + $0x18] sm:$0xff]
        %v187 = vld [vmem:[%s154 + $0x20] sm:$0xff]
        %v188 = vld [vmem:[%s154 + $0x28] sm:$0xff]
        %v189 = vld [vmem:[%s154 + $0x30] sm:$0xff]
        %v190 = vld [vmem:[%s154 + $0x38] sm:$0xff]
        %v191 = vld [vmem:[%s154 + $0x40] sm:$0xf]
        %v192 = vld [vmem:[%s154 + $0x48] sm:$0xf]
        %v193 = vld [vmem:[%s154 + $0x50] sm:$0xf]
        %v194 = vld [vmem:[%s154 + $0x58] sm:$0xf]
        %v195 = vld [vmem:[#allocation5] sm:$0x1f]
        %v196 = vld [vmem:[#allocation5 + $0x8] sm:$0x1f]
        %v197 = vld [vmem:[#allocation5 + $0x10] sm:$0xff]
        %v198 = vld [vmem:[#allocation5 + $0x18] sm:$0xff]
        %v199 = vld [vmem:[#allocation5 + $0x20] sm:$0xf]
        %v200 = vld [vmem:[#allocation5 + $0x28] sm:$0xff]
        %v201 = vld [vmem:[#allocation5 + $0x30] sm:$0xff]
        %v202 = vld [vmem:[#allocation5 + $0x38] sm:$0xff]
        %v203 = vld [vmem:[#allocation5 + $0x40] sm:$0xff]
        %v204 = vld [vmem:[#allocation5 + $0x48] sm:$0xff]
        %v205 = vld [vmem:[#allocation5 + $0x50] sm:$0xff]
        %v206 = vld [vmem:[#allocation5 + $0x58] sm:$0xf]
        %v207 = vld [vmem:[#allocation5 + $0x60] sm:$0xff]
        %v208 = vld [vmem:[#allocation5 + $0x68] sm:$0xff]
        %v209 = vld [vmem:[#allocation5 + $0x70] sm:$0xf]
        %211 = vset.pattern.permute.xlu0 0
        %212 = vperm.xlu0 %211, %v196
        %v213 = vpop.permute.xlu0 %212
        %vm215 = vcmask 162816
        %v217 = vsel %vm215, %v195, 0
        %vm219 = vcmask 1043456
        %v221 = vsel %vm219, %v191, 0
        %v224 = vsel %vm219, %v192, 0
        %v227 = vsel %vm219, %v193, 0
        %v230 = vsel %vm219, %v194, 0
        %232 = vmatpush.msra.mxu0 0.0
        %233 = vmatpush.msra.mxu0 0.0
        %234 = vmatpush.msra.mxu0 0.0
        %235 = vmatpush.msra.mxu0 0.0
        %236 = vmatpush.msra.mxu0 0.0
        %237 = vmatpush.msra.mxu0 0.0
        %238 = vmatpush.msra.mxu0 0.0
        %239 = vmatpush.msra.mxu0 0.0
        %240 = vmatpush.msra.mxu0 0.0
        %241 = vmatpush.msra.mxu0 0.0
        %242 = vmatpush.msra.mxu0 0.0
        %243 = vmatpush.msra.mxu0 0.0
        %244 = vmatpush.msra.mxu0 0.0
        %245 = vmatpush.msra.mxu0 %v221
        %246 = vmatpush.msra.mxu0 %v187
        %247 = vmatpush.msra.mxu0 %v183
        %248 = vmatmul.f32.gmra.mxu0 %v217
        %v249 = vpop.f32.mrf.mxu0
        %v250 = vadd.f32 %v213, %v249
        %251 = vdwg.mxu0
        %252 = vmatpush.msra.mxu0 0.0
        %253 = vmatpush.msra.mxu0 0.0
        %254 = vmatpush.msra.mxu0 0.0
        %255 = vmatpush.msra.mxu0 0.0
        %256 = vmatpush.msra.mxu0 0.0
        %257 = vmatpush.msra.mxu0 0.0
        %258 = vmatpush.msra.mxu0 0.0
        %259 = vmatpush.msra.mxu0 0.0
        %260 = vmatpush.msra.mxu0 0.0
        %261 = vmatpush.msra.mxu0 0.0
        %262 = vmatpush.msra.mxu0 0.0
        %263 = vmatpush.msra.mxu0 0.0
        %264 = vmatpush.msra.mxu0 0.0
        %265 = vmatpush.msra.mxu0 %v224
        %266 = vmatpush.msra.mxu0 %v188
        %267 = vmatpush.msra.mxu0 %v184
        %268 = vmatmul.f32.gmra.mxu0 %v217
        %v269 = vpop.f32.mrf.mxu0
        %v270 = vadd.f32 %v213, %v269
        %271 = vdwg.mxu0
        %272 = vmatpush.msra.mxu0 0.0
        %273 = vmatpush.msra.mxu0 0.0
        %274 = vmatpush.msra.mxu0 0.0
        %275 = vmatpush.msra.mxu0 0.0
        %276 = vmatpush.msra.mxu0 0.0
        %277 = vmatpush.msra.mxu0 0.0
        %278 = vmatpush.msra.mxu0 0.0
        %279 = vmatpush.msra.mxu0 0.0
        %280 = vmatpush.msra.mxu0 0.0
        %281 = vmatpush.msra.mxu0 0.0
        %282 = vmatpush.msra.mxu0 0.0
        %283 = vmatpush.msra.mxu0 0.0
        %284 = vmatpush.msra.mxu0 0.0
        %285 = vmatpush.msra.mxu0 %v227
        %286 = vmatpush.msra.mxu0 %v189
        %287 = vmatpush.msra.mxu0 %v185
        %288 = vmatmul.f32.gmra.mxu0 %v217
        %v289 = vpop.f32.mrf.mxu0
        %v290 = vadd.f32 %v213, %v289
        %291 = vdwg.mxu0
        %292 = vmatpush.msra.mxu0 0.0
        %293 = vmatpush.msra.mxu0 0.0
        %294 = vmatpush.msra.mxu0 0.0
        %295 = vmatpush.msra.mxu0 0.0
        %296 = vmatpush.msra.mxu0 0.0
        %297 = vmatpush.msra.mxu0 0.0
        %298 = vmatpush.msra.mxu0 0.0
        %299 = vmatpush.msra.mxu0 0.0
        %300 = vmatpush.msra.mxu0 0.0
        %301 = vmatpush.msra.mxu0 0.0
        %302 = vmatpush.msra.mxu0 0.0
        %303 = vmatpush.msra.mxu0 0.0
        %304 = vmatpush.msra.mxu0 0.0
        %305 = vmatpush.msra.mxu0 %v230
        %306 = vmatpush.msra.mxu0 %v190
        %307 = vmatpush.msra.mxu0 %v186
        %308 = vmatmul.f32.gmra.mxu0 %v217
        %v309 = vpop.f32.mrf.mxu0
        %v310 = vadd.f32 %v213, %v309
        %311 = vdwg.mxu0
        %vm312 = vcmask 1044480
        %v313 = vsel %vm312, %v250, -inf
        %v314 = vrot.slane %v313, 4
        %v315 = vmax.f32 %v313, %v314
        %v316 = vrot.slane %v315, 2
        %v317 = vmax.f32 %v315, %v316
        %v318 = vrot.slane %v317, 1
        %v319 = vmax.f32 %v317, %v318
        %v320 = vsel %vm312, %v270, -inf
        %v321 = vrot.slane %v320, 4
        %v322 = vmax.f32 %v320, %v321
        %v323 = vrot.slane %v322, 2
        %v324 = vmax.f32 %v322, %v323
        %v325 = vrot.slane %v324, 1
        %v326 = vmax.f32 %v324, %v325
        %v327 = vsel %vm312, %v290, -inf
        %v328 = vrot.slane %v327, 4
        %v329 = vmax.f32 %v327, %v328
        %v330 = vrot.slane %v329, 2
        %v331 = vmax.f32 %v329, %v330
        %v332 = vrot.slane %v331, 1
        %v333 = vmax.f32 %v331, %v332
        %v334 = vsel %vm312, %v310, -inf
        %v335 = vrot.slane %v334, 4
        %v336 = vmax.f32 %v334, %v335
        %v337 = vrot.slane %v336, 2
        %v338 = vmax.f32 %v336, %v337
        %v339 = vrot.slane %v338, 1
        %v340 = vmax.f32 %v338, %v339
        %v341 = vsub.f32 %v250, %v319
        %v342 = vsub.f32 %v270, %v326
        %v343 = vsub.f32 %v290, %v333
        %v344 = vsub.f32 %v310, %v340
        %v345 = vmul.f32 %v341, 1.442695
        %v346 = vpow.pop %v345
        %v347 = vmul.f32 %v342, 1.442695
        %v348 = vpow.pop %v347
        %v349 = vmul.f32 %v343, 1.442695
        %v350 = vpow.pop %v349
        %v351 = vmul.f32 %v344, 1.442695
        %v352 = vpow.pop %v351
        %v353 = vsel %vm312, %v346, 0.0
        %v354 = vrot.slane %v353, 4
        %v355 = vadd.f32 %v353, %v354
        %v356 = vrot.slane %v355, 2
        %v357 = vadd.f32 %v355, %v356
        %v358 = vrot.slane %v357, 1
        %v359 = vadd.f32 %v357, %v358
        %v360 = vsel %vm312, %v348, 0.0
        %v361 = vrot.slane %v360, 4
        %v362 = vadd.f32 %v360, %v361
        %v363 = vrot.slane %v362, 2
        %v364 = vadd.f32 %v362, %v363
        %v365 = vrot.slane %v364, 1
        %v366 = vadd.f32 %v364, %v365
        %v367 = vsel %vm312, %v350, 0.0
        %v368 = vrot.slane %v367, 4
        %v369 = vadd.f32 %v367, %v368
        %v370 = vrot.slane %v369, 2
        %v371 = vadd.f32 %v369, %v370
        %v372 = vrot.slane %v371, 1
        %v373 = vadd.f32 %v371, %v372
        %v374 = vsel %vm312, %v352, 0.0
        %v375 = vrot.slane %v374, 4
        %v376 = vadd.f32 %v374, %v375
        %v377 = vrot.slane %v376, 2
        %v378 = vadd.f32 %v376, %v377
        %v379 = vrot.slane %v378, 1
        %v380 = vadd.f32 %v378, %v379
        %v381 = vrcp.pop %v359
        %v382 = vmul.f32 %v359, %v381
        %v383 = vsub.f32 1.0, %v382
        %v384 = vmul.f32 %v381, %v383
        %v385 = vadd.f32 %v381, %v384
        %vm386 = vweird.f32 %v359
        %vm387 = vweird.f32 %v381
        %vm388 = vmor %vm386, %vm387
        %v389 = vsel %vm388, %v381, %v385
        %v390 = vand.u32 2147483647, %v359
        %vm391 = vcmp.eq.f32.partialorder %v390, 8.507059e+37
        %v392 = vand.u32 %v359, 2147483648
        %v393 = vor.u32 1.1754944e-38, %v392
        %v394 = vsel %vm391, %v393, %v389
        %v395 = vrcp.pop %v366
        %v396 = vmul.f32 %v366, %v395
        %v397 = vsub.f32 1.0, %v396
        %v398 = vmul.f32 %v395, %v397
        %v399 = vadd.f32 %v395, %v398
        %vm400 = vweird.f32 %v366
        %vm401 = vweird.f32 %v395
        %vm402 = vmor %vm400, %vm401
        %v403 = vsel %vm402, %v395, %v399
        %v404 = vand.u32 2147483647, %v366
        %vm405 = vcmp.eq.f32.partialorder %v404, 8.507059e+37
        %v406 = vand.u32 %v366, 2147483648
        %v407 = vor.u32 1.1754944e-38, %v406
        %v408 = vsel %vm405, %v407, %v403
        %v409 = vrcp.pop %v373
        %v410 = vmul.f32 %v373, %v409
        %v411 = vsub.f32 1.0, %v410
        %v412 = vmul.f32 %v409, %v411
        %v413 = vadd.f32 %v409, %v412
        %vm414 = vweird.f32 %v373
        %vm415 = vweird.f32 %v409
        %vm416 = vmor %vm414, %vm415
        %v417 = vsel %vm416, %v409, %v413
        %v418 = vand.u32 2147483647, %v373
        %vm419 = vcmp.eq.f32.partialorder %v418, 8.507059e+37
        %v420 = vand.u32 %v373, 2147483648
        %v421 = vor.u32 1.1754944e-38, %v420
        %v422 = vsel %vm419, %v421, %v417
        %v423 = vrcp.pop %v380
        %v424 = vmul.f32 %v380, %v423
        %v425 = vsub.f32 1.0, %v424
        %v426 = vmul.f32 %v423, %v425
        %v427 = vadd.f32 %v423, %v426
        %vm428 = vweird.f32 %v380
        %vm429 = vweird.f32 %v423
        %vm430 = vmor %vm428, %vm429
        %v431 = vsel %vm430, %v423, %v427
        %v432 = vand.u32 2147483647, %v380
        %vm433 = vcmp.eq.f32.partialorder %v432, 8.507059e+37
        %v434 = vand.u32 %v380, 2147483648
        %v435 = vor.u32 1.1754944e-38, %v434
        %v436 = vsel %vm433, %v435, %v431
        %v437 = vmul.f32 %v346, %v394
        %v438 = vmul.f32 %v348, %v408
        %v439 = vmul.f32 %v350, %v422
        %v440 = vmul.f32 %v352, %v436
        %vm441 = vcmask 39936
        %v443 = vsel %vm441, %v197, 0
        %v446 = vsel %vm441, %v198, 0
        %v449 = vsel %vm441, %v199, 0
        %v452 = vsel %vm312, %v437, 0
        %v455 = vsel %vm312, %v438, 0
        %v458 = vsel %vm312, %v439, 0
        %v461 = vsel %vm312, %v440, 0
        %463 = vmatpush.msra.mxu0 0.0
        %464 = vmatpush.msra.mxu0 0.0
        %465 = vmatpush.msra.mxu0 0.0
        %466 = vmatpush.msra.mxu0 0.0
        %467 = vmatpush.msra.mxu0 0.0
        %468 = vmatpush.msra.mxu0 0.0
        %469 = vmatpush.msra.mxu0 0.0
        %470 = vmatpush.msra.mxu0 0.0
        %471 = vmatpush.msra.mxu0 0.0
        %472 = vmatpush.msra.mxu0 0.0
        %473 = vmatpush.msra.mxu0 0.0
        %474 = vmatpush.msra.mxu0 0.0
        %475 = vmatpush.msra.mxu0 0.0
        %476 = vmatpush.msra.mxu0 0.0
        %477 = vmatpush.msra.mxu0 0.0
        %478 = vmatpush.msra.mxu0 %v452
        %479 = vmatmul.f32.gmra.mxu0 %v443
        %v480 = vpop.f32.mrf.mxu0
        %v481 = vadd.f32 0.0, %v480
        %482 = vmatmul.f32.gmra.mxu0 %v446
        %v483 = vpop.f32.mrf.mxu0
        %v484 = vadd.f32 0.0, %v483
        %485 = vmatmul.f32.gmra.mxu0 %v449
        %v486 = vpop.f32.mrf.mxu0
        %v487 = vadd.f32 0.0, %v486
        %488 = vdwg.mxu0
        %489 = vmatpush.msra.mxu0 0.0
        %490 = vmatpush.msra.mxu0 0.0
        %491 = vmatpush.msra.mxu0 0.0
        %492 = vmatpush.msra.mxu0 0.0
        %493 = vmatpush.msra.mxu0 0.0
        %494 = vmatpush.msra.mxu0 0.0
        %495 = vmatpush.msra.mxu0 0.0
        %496 = vmatpush.msra.mxu0 0.0
        %497 = vmatpush.msra.mxu0 0.0
        %498 = vmatpush.msra.mxu0 0.0
        %499 = vmatpush.msra.mxu0 0.0
        %500 = vmatpush.msra.mxu0 0.0
        %501 = vmatpush.msra.mxu0 0.0
        %502 = vmatpush.msra.mxu0 0.0
        %503 = vmatpush.msra.mxu0 0.0
        %504 = vmatpush.msra.mxu0 %v455
        %505 = vmatmul.f32.gmra.mxu0 %v443
        %v506 = vpop.f32.mrf.mxu0
        %v507 = vadd.f32 0.0, %v506
        %508 = vmatmul.f32.gmra.mxu0 %v446
        %v509 = vpop.f32.mrf.mxu0
        %v510 = vadd.f32 0.0, %v509
        %511 = vmatmul.f32.gmra.mxu0 %v449
        %v512 = vpop.f32.mrf.mxu0
        %v513 = vadd.f32 0.0, %v512
        %514 = vdwg.mxu0
        %515 = vmatpush.msra.mxu0 0.0
        %516 = vmatpush.msra.mxu0 0.0
        %517 = vmatpush.msra.mxu0 0.0
        %518 = vmatpush.msra.mxu0 0.0
        %519 = vmatpush.msra.mxu0 0.0
        %520 = vmatpush.msra.mxu0 0.0
        %521 = vmatpush.msra.mxu0 0.0
        %522 = vmatpush.msra.mxu0 0.0
        %523 = vmatpush.msra.mxu0 0.0
        %524 = vmatpush.msra.mxu0 0.0
        %525 = vmatpush.msra.mxu0 0.0
        %526 = vmatpush.msra.mxu0 0.0
        %527 = vmatpush.msra.mxu0 0.0
        %528 = vmatpush.msra.mxu0 0.0
        %529 = vmatpush.msra.mxu0 0.0
        %530 = vmatpush.msra.mxu0 %v458
        %531 = vmatmul.f32.gmra.mxu0 %v443
        %v532 = vpop.f32.mrf.mxu0
        %v533 = vadd.f32 0.0, %v532
        %534 = vmatmul.f32.gmra.mxu0 %v446
        %v535 = vpop.f32.mrf.mxu0
        %v536 = vadd.f32 0.0, %v535
        %537 = vmatmul.f32.gmra.mxu0 %v449
        %v538 = vpop.f32.mrf.mxu0
        %v539 = vadd.f32 0.0, %v538
        %540 = vdwg.mxu0
        %541 = vmatpush.msra.mxu0 0.0
        %542 = vmatpush.msra.mxu0 0.0
        %543 = vmatpush.msra.mxu0 0.0
        %544 = vmatpush.msra.mxu0 0.0
        %545 = vmatpush.msra.mxu0 0.0
        %546 = vmatpush.msra.mxu0 0.0
        %547 = vmatpush.msra.mxu0 0.0
        %548 = vmatpush.msra.mxu0 0.0
        %549 = vmatpush.msra.mxu0 0.0
        %550 = vmatpush.msra.mxu0 0.0
        %551 = vmatpush.msra.mxu0 0.0
        %552 = vmatpush.msra.mxu0 0.0
        %553 = vmatpush.msra.mxu0 0.0
        %554 = vmatpush.msra.mxu0 0.0
        %555 = vmatpush.msra.mxu0 0.0
        %556 = vmatpush.msra.mxu0 %v461
        %557 = vmatmul.f32.gmra.mxu0 %v443
        %v558 = vpop.f32.mrf.mxu0
        %v559 = vadd.f32 0.0, %v558
        %560 = vmatmul.f32.gmra.mxu0 %v446
        %v561 = vpop.f32.mrf.mxu0
        %v562 = vadd.f32 0.0, %v561
        %563 = vmatmul.f32.gmra.mxu0 %v449
        %v564 = vpop.f32.mrf.mxu0
        %v565 = vadd.f32 0.0, %v564
        %566 = vdwg.mxu0
        %v567 = vmul.f32 %v183, %v481
        %v568 = vmul.f32 %v184, %v507
        %v569 = vmul.f32 %v185, %v533
        %v570 = vmul.f32 %v186, %v559
        %v571 = vmul.f32 %v187, %v484
        %v572 = vmul.f32 %v188, %v510
        %v573 = vmul.f32 %v189, %v536
        %v574 = vmul.f32 %v190, %v562
        %v575 = vmul.f32 %v191, %v487
        %v576 = vmul.f32 %v192, %v513
        %v577 = vmul.f32 %v193, %v539
        %v578 = vmul.f32 %v194, %v565
        %v580 = vsel %vm215, %v200, 0
        %v583 = vsel %vm215, %v201, 0
        %v586 = vsel %vm219, %v575, 0
        %v589 = vsel %vm219, %v576, 0
        %v592 = vsel %vm219, %v577, 0
        %v595 = vsel %vm219, %v578, 0
        %597 = vmatpush.msra.mxu0 0.0
        %598 = vmatpush.msra.mxu0 0.0
        %599 = vmatpush.msra.mxu0 0.0
        %600 = vmatpush.msra.mxu0 0.0
        %601 = vmatpush.msra.mxu0 0.0
        %602 = vmatpush.msra.mxu0 0.0
        %603 = vmatpush.msra.mxu0 0.0
        %604 = vmatpush.msra.mxu0 0.0
        %605 = vmatpush.msra.mxu0 0.0
        %606 = vmatpush.msra.mxu0 0.0
        %607 = vmatpush.msra.mxu0 0.0
        %608 = vmatpush.msra.mxu0 0.0
        %609 = vmatpush.msra.mxu0 0.0
        %610 = vmatpush.msra.mxu0 %v586
        %611 = vmatpush.msra.mxu0 %v571
        %612 = vmatpush.msra.mxu0 %v567
        %613 = vmatmul.f32.gmra.mxu0 %v580
        %v614 = vpop.f32.mrf.mxu0
        %v615 = vadd.f32 0.0, %v614
        %616 = vmatmul.f32.gmra.mxu0 %v583
        %v617 = vpop.f32.mrf.mxu0
        %v618 = vadd.f32 0.0, %v617
        %619 = vdwg.mxu0
        %620 = vmatpush.msra.mxu0 0.0
        %621 = vmatpush.msra.mxu0 0.0
        %622 = vmatpush.msra.mxu0 0.0
        %623 = vmatpush.msra.mxu0 0.0
        %624 = vmatpush.msra.mxu0 0.0
        %625 = vmatpush.msra.mxu0 0.0
        %626 = vmatpush.msra.mxu0 0.0
        %627 = vmatpush.msra.mxu0 0.0
        %628 = vmatpush.msra.mxu0 0.0
        %629 = vmatpush.msra.mxu0 0.0
        %630 = vmatpush.msra.mxu0 0.0
        %631 = vmatpush.msra.mxu0 0.0
        %632 = vmatpush.msra.mxu0 0.0
        %633 = vmatpush.msra.mxu0 %v589
        %634 = vmatpush.msra.mxu0 %v572
        %635 = vmatpush.msra.mxu0 %v568
        %636 = vmatmul.f32.gmra.mxu0 %v580
        %v637 = vpop.f32.mrf.mxu0
        %v638 = vadd.f32 0.0, %v637
        %639 = vmatmul.f32.gmra.mxu0 %v583
        %v640 = vpop.f32.mrf.mxu0
        %v641 = vadd.f32 0.0, %v640
        %642 = vdwg.mxu0
        %643 = vmatpush.msra.mxu0 0.0
        %644 = vmatpush.msra.mxu0 0.0
        %645 = vmatpush.msra.mxu0 0.0
        %646 = vmatpush.msra.mxu0 0.0
        %647 = vmatpush.msra.mxu0 0.0
        %648 = vmatpush.msra.mxu0 0.0
        %649 = vmatpush.msra.mxu0 0.0
        %650 = vmatpush.msra.mxu0 0.0
        %651 = vmatpush.msra.mxu0 0.0
        %652 = vmatpush.msra.mxu0 0.0
        %653 = vmatpush.msra.mxu0 0.0
        %654 = vmatpush.msra.mxu0 0.0
        %655 = vmatpush.msra.mxu0 0.0
        %656 = vmatpush.msra.mxu0 %v592
        %657 = vmatpush.msra.mxu0 %v573
        %658 = vmatpush.msra.mxu0 %v569
        %659 = vmatmul.f32.gmra.mxu0 %v580
        %v660 = vpop.f32.mrf.mxu0
        %v661 = vadd.f32 0.0, %v660
        %662 = vmatmul.f32.gmra.mxu0 %v583
        %v663 = vpop.f32.mrf.mxu0
        %v664 = vadd.f32 0.0, %v663
        %665 = vdwg.mxu0
        %666 = vmatpush.msra.mxu0 0.0
        %667 = vmatpush.msra.mxu0 0.0
        %668 = vmatpush.msra.mxu0 0.0
        %669 = vmatpush.msra.mxu0 0.0
        %670 = vmatpush.msra.mxu0 0.0
        %671 = vmatpush.msra.mxu0 0.0
        %672 = vmatpush.msra.mxu0 0.0
        %673 = vmatpush.msra.mxu0 0.0
        %674 = vmatpush.msra.mxu0 0.0
        %675 = vmatpush.msra.mxu0 0.0
        %676 = vmatpush.msra.mxu0 0.0
        %677 = vmatpush.msra.mxu0 0.0
        %678 = vmatpush.msra.mxu0 0.0
        %679 = vmatpush.msra.mxu0 %v595
        %680 = vmatpush.msra.mxu0 %v574
        %681 = vmatpush.msra.mxu0 %v570
        %682 = vmatmul.f32.gmra.mxu0 %v580
        %v683 = vpop.f32.mrf.mxu0
        %v684 = vadd.f32 0.0, %v683
        %685 = vmatmul.f32.gmra.mxu0 %v583
        %v686 = vpop.f32.mrf.mxu0
        %v687 = vadd.f32 0.0, %v686
        %688 = vdwg.mxu0
        %690 = vset.pattern.permute.xlu0 1
        %691 = vperm.xlu0 %690, %v202
        %v692 = vpop.permute.xlu0 %691
        %695 = vset.pattern.permute.xlu0 1
        %696 = vperm.xlu0 %695, %v203
        %v697 = vpop.permute.xlu0 %696
        %v699 = vmul.f32 %v692, %v615
        %v700 = vmul.f32 %v692, %v638
        %v701 = vmul.f32 %v692, %v661
        %v702 = vmul.f32 %v692, %v684
        %v703 = vmul.f32 %v697, %v618
        %v704 = vmul.f32 %v697, %v641
        %v705 = vmul.f32 %v697, %v664
        %v706 = vmul.f32 %v697, %v687
        %707 = vset.pattern.permute.xlu0 0
        %708 = vperm.xlu0 %707, %v202
        %v709 = vpop.permute.xlu0 %708
        %711 = vset.pattern.permute.xlu0 0
        %712 = vperm.xlu0 %711, %v203
        %v713 = vpop.permute.xlu0 %712
        %v715 = vmul.f32 %v709, %v615
        %v716 = vmul.f32 %v709, %v638
        %v717 = vmul.f32 %v709, %v661
        %v718 = vmul.f32 %v709, %v684
        %v719 = vmul.f32 %v713, %v618
        %v720 = vmul.f32 %v713, %v641
        %v721 = vmul.f32 %v713, %v664
        %v722 = vmul.f32 %v713, %v687
        %v723 = vadd.f32 %v715, %v699
        %v724 = vadd.f32 %v716, %v700
        %v725 = vadd.f32 %v717, %v701
        %v726 = vadd.f32 %v718, %v702
        %v727 = vadd.f32 %v719, %v703
        %v728 = vadd.f32 %v720, %v704
        %v729 = vadd.f32 %v721, %v705
        %v730 = vadd.f32 %v722, %v706
        %vm731 = vcmp.ge.f32.partialorder %v723, 0.0
        %vm732 = vcmp.ge.f32.partialorder %v724, 0.0
        %vm733 = vcmp.ge.f32.partialorder %v725, 0.0
        %vm734 = vcmp.ge.f32.partialorder %v726, 0.0
        %vm735 = vcmp.ge.f32.partialorder %v727, 0.0
        %vm736 = vcmp.ge.f32.partialorder %v728, 0.0
        %vm737 = vcmp.ge.f32.partialorder %v729, 0.0
        %vm738 = vcmp.ge.f32.partialorder %v730, 0.0
        %v739 = vmul.f32 %v723, 0.2
        %v740 = vmul.f32 %v724, 0.2
        %v741 = vmul.f32 %v725, 0.2
        %v742 = vmul.f32 %v726, 0.2
        %v743 = vmul.f32 %v727, 0.2
        %v744 = vmul.f32 %v728, 0.2
        %v745 = vmul.f32 %v729, 0.2
        %v746 = vmul.f32 %v730, 0.2
        %v747 = vsel %vm731, %v723, %v739
        %v748 = vsel %vm732, %v724, %v740
        %v749 = vsel %vm733, %v725, %v741
        %v750 = vsel %vm734, %v726, %v742
        %v751 = vsel %vm735, %v727, %v743
        %v752 = vsel %vm736, %v728, %v744
        %v753 = vsel %vm737, %v729, %v745
        %v754 = vsel %vm738, %v730, %v746
        %v755 = vperm.slane %v615, 0
        %v756 = vperm.slane %v638, 0
        %v757 = vperm.slane %v661, 0
        %v758 = vperm.slane %v684, 0
        %v759 = vmul.f32 %v709, %v755
        %v760 = vmul.f32 %v709, %v756
        %v761 = vmul.f32 %v709, %v757
        %v762 = vmul.f32 %v709, %v758
        %v763 = vmul.f32 %v713, %v755
        %v764 = vmul.f32 %v713, %v756
        %v765 = vmul.f32 %v713, %v757
        %v766 = vmul.f32 %v713, %v758
        %v767 = vadd.f32 %v759, %v699
        %v768 = vadd.f32 %v760, %v700
        %v769 = vadd.f32 %v761, %v701
        %v770 = vadd.f32 %v762, %v702
        %v771 = vadd.f32 %v763, %v703
        %v772 = vadd.f32 %v764, %v704
        %v773 = vadd.f32 %v765, %v705
        %v774 = vadd.f32 %v766, %v706
        %vm775 = vcmp.ge.f32.partialorder %v767, 0.0
        %vm776 = vcmp.ge.f32.partialorder %v768, 0.0
        %vm777 = vcmp.ge.f32.partialorder %v769, 0.0
        %vm778 = vcmp.ge.f32.partialorder %v770, 0.0
        %vm779 = vcmp.ge.f32.partialorder %v771, 0.0
        %vm780 = vcmp.ge.f32.partialorder %v772, 0.0
        %vm781 = vcmp.ge.f32.partialorder %v773, 0.0
        %vm782 = vcmp.ge.f32.partialorder %v774, 0.0
        %v783 = vmul.f32 %v767, 0.2
        %v784 = vmul.f32 %v768, 0.2
        %v785 = vmul.f32 %v769, 0.2
        %v786 = vmul.f32 %v770, 0.2
        %v787 = vmul.f32 %v771, 0.2
        %v788 = vmul.f32 %v772, 0.2
        %v789 = vmul.f32 %v773, 0.2
        %v790 = vmul.f32 %v774, 0.2
        %v791 = vsel %vm775, %v767, %v783
        %v792 = vsel %vm776, %v768, %v784
        %v793 = vsel %vm777, %v769, %v785
        %v794 = vsel %vm778, %v770, %v786
        %v795 = vsel %vm779, %v771, %v787
        %v796 = vsel %vm780, %v772, %v788
        %v797 = vsel %vm781, %v773, %v789
        %v798 = vsel %vm782, %v774, %v790
        %v799 = vmax.f32 %v747, %v791
        %v800 = vmax.f32 %v748, %v792
        %v801 = vmax.f32 %v749, %v793
        %v802 = vmax.f32 %v750, %v794
        %v803 = vmax.f32 %v751, %v795
        %v804 = vmax.f32 %v752, %v796
        %v805 = vmax.f32 %v753, %v797
        %v806 = vmax.f32 %v754, %v798
        %v807 = vperm.slane %v615, 4
        %v808 = vperm.slane %v638, 4
        %v809 = vperm.slane %v661, 4
        %v810 = vperm.slane %v684, 4
        %v811 = vmul.f32 %v709, %v807
        %v812 = vmul.f32 %v709, %v808
        %v813 = vmul.f32 %v709, %v809
        %v814 = vmul.f32 %v709, %v810
        %v815 = vmul.f32 %v713, %v807
        %v816 = vmul.f32 %v713, %v808
        %v817 = vmul.f32 %v713, %v809
        %v818 = vmul.f32 %v713, %v810
        %v819 = vadd.f32 %v811, %v699
        %v820 = vadd.f32 %v812, %v700
        %v821 = vadd.f32 %v813, %v701
        %v822 = vadd.f32 %v814, %v702
        %v823 = vadd.f32 %v815, %v703
        %v824 = vadd.f32 %v816, %v704
        %v825 = vadd.f32 %v817, %v705
        %v826 = vadd.f32 %v818, %v706
        %vm827 = vcmp.ge.f32.partialorder %v819, 0.0
        %vm828 = vcmp.ge.f32.partialorder %v820, 0.0
        %vm829 = vcmp.ge.f32.partialorder %v821, 0.0
        %vm830 = vcmp.ge.f32.partialorder %v822, 0.0
        %vm831 = vcmp.ge.f32.partialorder %v823, 0.0
        %vm832 = vcmp.ge.f32.partialorder %v824, 0.0
        %vm833 = vcmp.ge.f32.partialorder %v825, 0.0
        %vm834 = vcmp.ge.f32.partialorder %v826, 0.0
        %v835 = vmul.f32 %v819, 0.2
        %v836 = vmul.f32 %v820, 0.2
        %v837 = vmul.f32 %v821, 0.2
        %v838 = vmul.f32 %v822, 0.2
        %v839 = vmul.f32 %v823, 0.2
        %v840 = vmul.f32 %v824, 0.2
        %v841 = vmul.f32 %v825, 0.2
        %v842 = vmul.f32 %v826, 0.2
        %v843 = vsel %vm827, %v819, %v835
        %v844 = vsel %vm828, %v820, %v836
        %v845 = vsel %vm829, %v821, %v837
        %v846 = vsel %vm830, %v822, %v838
        %v847 = vsel %vm831, %v823, %v839
        %v848 = vsel %vm832, %v824, %v840
        %v849 = vsel %vm833, %v825, %v841
        %v850 = vsel %vm834, %v826, %v842
        %v851 = vmax.f32 %v799, %v843
        %v852 = vmax.f32 %v800, %v844
        %v853 = vmax.f32 %v801, %v845
        %v854 = vmax.f32 %v802, %v846
        %v855 = vmax.f32 %v803, %v847
        %v856 = vmax.f32 %v804, %v848
        %v857 = vmax.f32 %v805, %v849
        %v858 = vmax.f32 %v806, %v850
        %v859 = vperm.slane %v618, 0
        %v860 = vperm.slane %v641, 0
        %v861 = vperm.slane %v664, 0
        %v862 = vperm.slane %v687, 0
        %v863 = vmul.f32 %v709, %v859
        %v864 = vmul.f32 %v709, %v860
        %v865 = vmul.f32 %v709, %v861
        %v866 = vmul.f32 %v709, %v862
        %v867 = vmul.f32 %v713, %v859
        %v868 = vmul.f32 %v713, %v860
        %v869 = vmul.f32 %v713, %v861
        %v870 = vmul.f32 %v713, %v862
        %v871 = vadd.f32 %v863, %v699
        %v872 = vadd.f32 %v864, %v700
        %v873 = vadd.f32 %v865, %v701
        %v874 = vadd.f32 %v866, %v702
        %v875 = vadd.f32 %v867, %v703
        %v876 = vadd.f32 %v868, %v704
        %v877 = vadd.f32 %v869, %v705
        %v878 = vadd.f32 %v870, %v706
        %vm879 = vcmp.ge.f32.partialorder %v871, 0.0
        %vm880 = vcmp.ge.f32.partialorder %v872, 0.0
        %vm881 = vcmp.ge.f32.partialorder %v873, 0.0
        %vm882 = vcmp.ge.f32.partialorder %v874, 0.0
        %vm883 = vcmp.ge.f32.partialorder %v875, 0.0
        %vm884 = vcmp.ge.f32.partialorder %v876, 0.0
        %vm885 = vcmp.ge.f32.partialorder %v877, 0.0
        %vm886 = vcmp.ge.f32.partialorder %v878, 0.0
        %v887 = vmul.f32 %v871, 0.2
        %v888 = vmul.f32 %v872, 0.2
        %v889 = vmul.f32 %v873, 0.2
        %v890 = vmul.f32 %v874, 0.2
        %v891 = vmul.f32 %v875, 0.2
        %v892 = vmul.f32 %v876, 0.2
        %v893 = vmul.f32 %v877, 0.2
        %v894 = vmul.f32 %v878, 0.2
        %v895 = vsel %vm879, %v871, %v887
        %v896 = vsel %vm880, %v872, %v888
        %v897 = vsel %vm881, %v873, %v889
        %v898 = vsel %vm882, %v874, %v890
        %v899 = vsel %vm883, %v875, %v891
        %v900 = vsel %vm884, %v876, %v892
        %v901 = vsel %vm885, %v877, %v893
        %v902 = vsel %vm886, %v878, %v894
        %v903 = vmax.f32 %v851, %v895
        %v904 = vmax.f32 %v852, %v896
        %v905 = vmax.f32 %v853, %v897
        %v906 = vmax.f32 %v854, %v898
        %v907 = vmax.f32 %v855, %v899
        %v908 = vmax.f32 %v856, %v900
        %v909 = vmax.f32 %v857, %v901
        %v910 = vmax.f32 %v858, %v902
        %v911 = vperm.slane %v618, 4
        %v912 = vperm.slane %v641, 4
        %v913 = vperm.slane %v664, 4
        %v914 = vperm.slane %v687, 4
        %v915 = vmul.f32 %v709, %v911
        %v916 = vmul.f32 %v709, %v912
        %v917 = vmul.f32 %v709, %v913
        %v918 = vmul.f32 %v709, %v914
        %v919 = vmul.f32 %v713, %v911
        %v920 = vmul.f32 %v713, %v912
        %v921 = vmul.f32 %v713, %v913
        %v922 = vmul.f32 %v713, %v914
        %v923 = vadd.f32 %v915, %v699
        %v924 = vadd.f32 %v916, %v700
        %v925 = vadd.f32 %v917, %v701
        %v926 = vadd.f32 %v918, %v702
        %v927 = vadd.f32 %v919, %v703
        %v928 = vadd.f32 %v920, %v704
        %v929 = vadd.f32 %v921, %v705
        %v930 = vadd.f32 %v922, %v706
        %vm931 = vcmp.ge.f32.partialorder %v923, 0.0
        %vm932 = vcmp.ge.f32.partialorder %v924, 0.0
        %vm933 = vcmp.ge.f32.partialorder %v925, 0.0
        %vm934 = vcmp.ge.f32.partialorder %v926, 0.0
        %vm935 = vcmp.ge.f32.partialorder %v927, 0.0
        %vm936 = vcmp.ge.f32.partialorder %v928, 0.0
        %vm937 = vcmp.ge.f32.partialorder %v929, 0.0
        %vm938 = vcmp.ge.f32.partialorder %v930, 0.0
        %v939 = vmul.f32 %v923, 0.2
        %v940 = vmul.f32 %v924, 0.2
        %v941 = vmul.f32 %v925, 0.2
        %v942 = vmul.f32 %v926, 0.2
        %v943 = vmul.f32 %v927, 0.2
        %v944 = vmul.f32 %v928, 0.2
        %v945 = vmul.f32 %v929, 0.2
        %v946 = vmul.f32 %v930, 0.2
        %v947 = vsel %vm931, %v923, %v939
        %v948 = vsel %vm932, %v924, %v940
        %v949 = vsel %vm933, %v925, %v941
        %v950 = vsel %vm934, %v926, %v942
        %v951 = vsel %vm935, %v927, %v943
        %v952 = vsel %vm936, %v928, %v944
        %v953 = vsel %vm937, %v929, %v945
        %v954 = vsel %vm938, %v930, %v946
        %v955 = vmax.f32 %v903, %v947
        %v956 = vmax.f32 %v904, %v948
        %v957 = vmax.f32 %v905, %v949
        %v958 = vmax.f32 %v906, %v950
        %v959 = vmax.f32 %v907, %v951
        %v960 = vmax.f32 %v908, %v952
        %v961 = vmax.f32 %v909, %v953
        %v962 = vmax.f32 %v910, %v954
        %v963 = vsub.f32 %v747, %v955
        %v964 = vsub.f32 %v748, %v956
        %v965 = vsub.f32 %v749, %v957
        %v966 = vsub.f32 %v750, %v958
        %v967 = vsub.f32 %v751, %v959
        %v968 = vsub.f32 %v752, %v960
        %v969 = vsub.f32 %v753, %v961
        %v970 = vsub.f32 %v754, %v962
        %v971 = vmul.f32 %v963, 1.442695
        %v972 = vpow.pop %v971
        %v973 = vmul.f32 %v964, 1.442695
        %v974 = vpow.pop %v973
        %v975 = vmul.f32 %v965, 1.442695
        %v976 = vpow.pop %v975
        %v977 = vmul.f32 %v966, 1.442695
        %v978 = vpow.pop %v977
        %v979 = vmul.f32 %v967, 1.442695
        %v980 = vpow.pop %v979
        %v981 = vmul.f32 %v968, 1.442695
        %v982 = vpow.pop %v981
        %v983 = vmul.f32 %v969, 1.442695
        %v984 = vpow.pop %v983
        %v985 = vmul.f32 %v970, 1.442695
        %v986 = vpow.pop %v985
        %v987 = vmul.f32 %v972, %v615
        %v988 = vmul.f32 %v974, %v638
        %v989 = vmul.f32 %v976, %v661
        %v990 = vmul.f32 %v978, %v684
        %v991 = vmul.f32 %v980, %v618
        %v992 = vmul.f32 %v982, %v641
        %v993 = vmul.f32 %v984, %v664
        %v994 = vmul.f32 %v986, %v687
        %v995 = vsub.f32 %v791, %v955
        %v996 = vsub.f32 %v792, %v956
        %v997 = vsub.f32 %v793, %v957
        %v998 = vsub.f32 %v794, %v958
        %v999 = vsub.f32 %v795, %v959
        %v1000 = vsub.f32 %v796, %v960
        %v1001 = vsub.f32 %v797, %v961
        %v1002 = vsub.f32 %v798, %v962
        %v1003 = vmul.f32 %v995, 1.442695
        %v1004 = vpow.pop %v1003
        %v1005 = vmul.f32 %v996, 1.442695
        %v1006 = vpow.pop %v1005
        %v1007 = vmul.f32 %v997, 1.442695
        %v1008 = vpow.pop %v1007
        %v1009 = vmul.f32 %v998, 1.442695
        %v1010 = vpow.pop %v1009
        %v1011 = vmul.f32 %v999, 1.442695
        %v1012 = vpow.pop %v1011
        %v1013 = vmul.f32 %v1000, 1.442695
        %v1014 = vpow.pop %v1013
        %v1015 = vmul.f32 %v1001, 1.442695
        %v1016 = vpow.pop %v1015
        %v1017 = vmul.f32 %v1002, 1.442695
        %v1018 = vpow.pop %v1017
        %v1019 = vadd.f32 %v972, %v1004
        %v1020 = vadd.f32 %v974, %v1006
        %v1021 = vadd.f32 %v976, %v1008
        %v1022 = vadd.f32 %v978, %v1010
        %v1023 = vadd.f32 %v980, %v1012
        %v1024 = vadd.f32 %v982, %v1014
        %v1025 = vadd.f32 %v984, %v1016
        %v1026 = vadd.f32 %v986, %v1018
        %v1027 = vmul.f32 %v1004, %v755
        %v1028 = vmul.f32 %v1006, %v756
        %v1029 = vmul.f32 %v1008, %v757
        %v1030 = vmul.f32 %v1010, %v758
        %v1031 = vmul.f32 %v1012, %v755
        %v1032 = vmul.f32 %v1014, %v756
        %v1033 = vmul.f32 %v1016, %v757
        %v1034 = vmul.f32 %v1018, %v758
        %v1035 = vadd.f32 %v987, %v1027
        %v1036 = vadd.f32 %v988, %v1028
        %v1037 = vadd.f32 %v989, %v1029
        %v1038 = vadd.f32 %v990, %v1030
        %v1039 = vadd.f32 %v991, %v1031
        %v1040 = vadd.f32 %v992, %v1032
        %v1041 = vadd.f32 %v993, %v1033
        %v1042 = vadd.f32 %v994, %v1034
        %v1043 = vsub.f32 %v843, %v955
        %v1044 = vsub.f32 %v844, %v956
        %v1045 = vsub.f32 %v845, %v957
        %v1046 = vsub.f32 %v846, %v958
        %v1047 = vsub.f32 %v847, %v959
        %v1048 = vsub.f32 %v848, %v960
        %v1049 = vsub.f32 %v849, %v961
        %v1050 = vsub.f32 %v850, %v962
        %v1051 = vmul.f32 %v1043, 1.442695
        %v1052 = vpow.pop %v1051
        %v1053 = vmul.f32 %v1044, 1.442695
        %v1054 = vpow.pop %v1053
        %v1055 = vmul.f32 %v1045, 1.442695
        %v1056 = vpow.pop %v1055
        %v1057 = vmul.f32 %v1046, 1.442695
        %v1058 = vpow.pop %v1057
        %v1059 = vmul.f32 %v1047, 1.442695
        %v1060 = vpow.pop %v1059
        %v1061 = vmul.f32 %v1048, 1.442695
        %v1062 = vpow.pop %v1061
        %v1063 = vmul.f32 %v1049, 1.442695
        %v1064 = vpow.pop %v1063
        %v1065 = vmul.f32 %v1050, 1.442695
        %v1066 = vpow.pop %v1065
        %v1067 = vadd.f32 %v1019, %v1052
        %v1068 = vadd.f32 %v1020, %v1054
        %v1069 = vadd.f32 %v1021, %v1056
        %v1070 = vadd.f32 %v1022, %v1058
        %v1071 = vadd.f32 %v1023, %v1060
        %v1072 = vadd.f32 %v1024, %v1062
        %v1073 = vadd.f32 %v1025, %v1064
        %v1074 = vadd.f32 %v1026, %v1066
        %v1075 = vmul.f32 %v1052, %v807
        %v1076 = vmul.f32 %v1054, %v808
        %v1077 = vmul.f32 %v1056, %v809
        %v1078 = vmul.f32 %v1058, %v810
        %v1079 = vmul.f32 %v1060, %v807
        %v1080 = vmul.f32 %v1062, %v808
        %v1081 = vmul.f32 %v1064, %v809
        %v1082 = vmul.f32 %v1066, %v810
        %v1083 = vadd.f32 %v1035, %v1075
        %v1084 = vadd.f32 %v1036, %v1076
        %v1085 = vadd.f32 %v1037, %v1077
        %v1086 = vadd.f32 %v1038, %v1078
        %v1087 = vadd.f32 %v1039, %v1079
        %v1088 = vadd.f32 %v1040, %v1080
        %v1089 = vadd.f32 %v1041, %v1081
        %v1090 = vadd.f32 %v1042, %v1082
        %v1091 = vsub.f32 %v895, %v955
        %v1092 = vsub.f32 %v896, %v956
        %v1093 = vsub.f32 %v897, %v957
        %v1094 = vsub.f32 %v898, %v958
        %v1095 = vsub.f32 %v899, %v959
        %v1096 = vsub.f32 %v900, %v960
        %v1097 = vsub.f32 %v901, %v961
        %v1098 = vsub.f32 %v902, %v962
        %v1099 = vmul.f32 %v1091, 1.442695
        %v1100 = vpow.pop %v1099
        %v1101 = vmul.f32 %v1092, 1.442695
        %v1102 = vpow.pop %v1101
        %v1103 = vmul.f32 %v1093, 1.442695
        %v1104 = vpow.pop %v1103
        %v1105 = vmul.f32 %v1094, 1.442695
        %v1106 = vpow.pop %v1105
        %v1107 = vmul.f32 %v1095, 1.442695
        %v1108 = vpow.pop %v1107
        %v1109 = vmul.f32 %v1096, 1.442695
        %v1110 = vpow.pop %v1109
        %v1111 = vmul.f32 %v1097, 1.442695
        %v1112 = vpow.pop %v1111
        %v1113 = vmul.f32 %v1098, 1.442695
        %v1114 = vpow.pop %v1113
        %v1115 = vadd.f32 %v1067, %v1100
        %v1116 = vadd.f32 %v1068, %v1102
        %v1117 = vadd.f32 %v1069, %v1104
        %v1118 = vadd.f32 %v1070, %v1106
        %v1119 = vadd.f32 %v1071, %v1108
        %v1120 = vadd.f32 %v1072, %v1110
        %v1121 = vadd.f32 %v1073, %v1112
        %v1122 = vadd.f32 %v1074, %v1114
        %v1123 = vmul.f32 %v1100, %v859
        %v1124 = vmul.f32 %v1102, %v860
        %v1125 = vmul.f32 %v1104, %v861
        %v1126 = vmul.f32 %v1106, %v862
        %v1127 = vmul.f32 %v1108, %v859
        %v1128 = vmul.f32 %v1110, %v860
        %v1129 = vmul.f32 %v1112, %v861
        %v1130 = vmul.f32 %v1114, %v862
        %v1131 = vadd.f32 %v1083, %v1123
        %v1132 = vadd.f32 %v1084, %v1124
        %v1133 = vadd.f32 %v1085, %v1125
        %v1134 = vadd.f32 %v1086, %v1126
        %v1135 = vadd.f32 %v1087, %v1127
        %v1136 = vadd.f32 %v1088, %v1128
        %v1137 = vadd.f32 %v1089, %v1129
        %v1138 = vadd.f32 %v1090, %v1130
        %v1139 = vsub.f32 %v947, %v955
        %v1140 = vsub.f32 %v948, %v956
        %v1141 = vsub.f32 %v949, %v957
        %v1142 = vsub.f32 %v950, %v958
        %v1143 = vsub.f32 %v951, %v959
        %v1144 = vsub.f32 %v952, %v960
        %v1145 = vsub.f32 %v953, %v961
        %v1146 = vsub.f32 %v954, %v962
        %v1147 = vmul.f32 %v1139, 1.442695
        %v1148 = vpow.pop %v1147
        %v1149 = vmul.f32 %v1140, 1.442695
        %v1150 = vpow.pop %v1149
        %v1151 = vmul.f32 %v1141, 1.442695
        %v1152 = vpow.pop %v1151
        %v1153 = vmul.f32 %v1142, 1.442695
        %v1154 = vpow.pop %v1153
        %v1155 = vmul.f32 %v1143, 1.442695
        %v1156 = vpow.pop %v1155
        %v1157 = vmul.f32 %v1144, 1.442695
        %v1158 = vpow.pop %v1157
        %v1159 = vmul.f32 %v1145, 1.442695
        %v1160 = vpow.pop %v1159
        %v1161 = vmul.f32 %v1146, 1.442695
        %v1162 = vpow.pop %v1161
        %v1163 = vadd.f32 %v1115, %v1148
        %v1164 = vadd.f32 %v1116, %v1150
        %v1165 = vadd.f32 %v1117, %v1152
        %v1166 = vadd.f32 %v1118, %v1154
        %v1167 = vadd.f32 %v1119, %v1156
        %v1168 = vadd.f32 %v1120, %v1158
        %v1169 = vadd.f32 %v1121, %v1160
        %v1170 = vadd.f32 %v1122, %v1162
        %v1171 = vmul.f32 %v1148, %v911
        %v1172 = vmul.f32 %v1150, %v912
        %v1173 = vmul.f32 %v1152, %v913
        %v1174 = vmul.f32 %v1154, %v914
        %v1175 = vmul.f32 %v1156, %v911
        %v1176 = vmul.f32 %v1158, %v912
        %v1177 = vmul.f32 %v1160, %v913
        %v1178 = vmul.f32 %v1162, %v914
        %v1179 = vadd.f32 %v1131, %v1171
        %v1180 = vadd.f32 %v1132, %v1172
        %v1181 = vadd.f32 %v1133, %v1173
        %v1182 = vadd.f32 %v1134, %v1174
        %v1183 = vadd.f32 %v1135, %v1175
        %v1184 = vadd.f32 %v1136, %v1176
        %v1185 = vadd.f32 %v1137, %v1177
        %v1186 = vadd.f32 %v1138, %v1178
        %1187 = vset.pattern.permute.xlu0 2
        %1188 = vperm.xlu0 %1187, %v202
        %v1189 = vpop.permute.xlu0 %1188
        %1191 = vset.pattern.permute.xlu0 2
        %1192 = vperm.xlu0 %1191, %v203
        %v1193 = vpop.permute.xlu0 %1192
        %v1195 = vmul.f32 %v1189, %v1179
        %v1196 = vmul.f32 %v1189, %v1180
        %v1197 = vmul.f32 %v1189, %v1181
        %v1198 = vmul.f32 %v1189, %v1182
        %v1199 = vmul.f32 %v1193, %v1183
        %v1200 = vmul.f32 %v1193, %v1184
        %v1201 = vmul.f32 %v1193, %v1185
        %v1202 = vmul.f32 %v1193, %v1186
        %v1203 = vrcp.pop %v1163
        %v1204 = vmul.f32 %v1163, %v1203
        %v1205 = vsub.f32 1.0, %v1204
        %v1206 = vmul.f32 %v1203, %v1205
        %v1207 = vadd.f32 %v1203, %v1206
        %vm1208 = vweird.f32 %v1163
        %vm1209 = vweird.f32 %v1203
        %vm1210 = vmor %vm1208, %vm1209
        %v1211 = vsel %vm1210, %v1203, %v1207
        %v1212 = vand.u32 2147483647, %v1163
        %vm1213 = vcmp.eq.f32.partialorder %v1212, 8.507059e+37
        %v1214 = vand.u32 %v1163, 2147483648
        %v1215 = vor.u32 1.1754944e-38, %v1214
        %v1216 = vsel %vm1213, %v1215, %v1211
        %v1217 = vrcp.pop %v1164
        %v1218 = vmul.f32 %v1164, %v1217
        %v1219 = vsub.f32 1.0, %v1218
        %v1220 = vmul.f32 %v1217, %v1219
        %v1221 = vadd.f32 %v1217, %v1220
        %vm1222 = vweird.f32 %v1164
        %vm1223 = vweird.f32 %v1217
        %vm1224 = vmor %vm1222, %vm1223
        %v1225 = vsel %vm1224, %v1217, %v1221
        %v1226 = vand.u32 2147483647, %v1164
        %vm1227 = vcmp.eq.f32.partialorder %v1226, 8.507059e+37
        %v1228 = vand.u32 %v1164, 2147483648
        %v1229 = vor.u32 1.1754944e-38, %v1228
        %v1230 = vsel %vm1227, %v1229, %v1225
        %v1231 = vrcp.pop %v1165
        %v1232 = vmul.f32 %v1165, %v1231
        %v1233 = vsub.f32 1.0, %v1232
        %v1234 = vmul.f32 %v1231, %v1233
        %v1235 = vadd.f32 %v1231, %v1234
        %vm1236 = vweird.f32 %v1165
        %vm1237 = vweird.f32 %v1231
        %vm1238 = vmor %vm1236, %vm1237
        %v1239 = vsel %vm1238, %v1231, %v1235
        %v1240 = vand.u32 2147483647, %v1165
        %vm1241 = vcmp.eq.f32.partialorder %v1240, 8.507059e+37
        %v1242 = vand.u32 %v1165, 2147483648
        %v1243 = vor.u32 1.1754944e-38, %v1242
        %v1244 = vsel %vm1241, %v1243, %v1239
        %v1245 = vrcp.pop %v1166
        %v1246 = vmul.f32 %v1166, %v1245
        %v1247 = vsub.f32 1.0, %v1246
        %v1248 = vmul.f32 %v1245, %v1247
        %v1249 = vadd.f32 %v1245, %v1248
        %vm1250 = vweird.f32 %v1166
        %vm1251 = vweird.f32 %v1245
        %vm1252 = vmor %vm1250, %vm1251
        %v1253 = vsel %vm1252, %v1245, %v1249
        %v1254 = vand.u32 2147483647, %v1166
        %vm1255 = vcmp.eq.f32.partialorder %v1254, 8.507059e+37
        %v1256 = vand.u32 %v1166, 2147483648
        %v1257 = vor.u32 1.1754944e-38, %v1256
        %v1258 = vsel %vm1255, %v1257, %v1253
        %v1259 = vrcp.pop %v1167
        %v1260 = vmul.f32 %v1167, %v1259
        %v1261 = vsub.f32 1.0, %v1260
        %v1262 = vmul.f32 %v1259, %v1261
        %v1263 = vadd.f32 %v1259, %v1262
        %vm1264 = vweird.f32 %v1167
        %vm1265 = vweird.f32 %v1259
        %vm1266 = vmor %vm1264, %vm1265
        %v1267 = vsel %vm1266, %v1259, %v1263
        %v1268 = vand.u32 2147483647, %v1167
        %vm1269 = vcmp.eq.f32.partialorder %v1268, 8.507059e+37
        %v1270 = vand.u32 %v1167, 2147483648
        %v1271 = vor.u32 1.1754944e-38, %v1270
        %v1272 = vsel %vm1269, %v1271, %v1267
        %v1273 = vrcp.pop %v1168
        %v1274 = vmul.f32 %v1168, %v1273
        %v1275 = vsub.f32 1.0, %v1274
        %v1276 = vmul.f32 %v1273, %v1275
        %v1277 = vadd.f32 %v1273, %v1276
        %vm1278 = vweird.f32 %v1168
        %vm1279 = vweird.f32 %v1273
        %vm1280 = vmor %vm1278, %vm1279
        %v1281 = vsel %vm1280, %v1273, %v1277
        %v1282 = vand.u32 2147483647, %v1168
        %vm1283 = vcmp.eq.f32.partialorder %v1282, 8.507059e+37
        %v1284 = vand.u32 %v1168, 2147483648
        %v1285 = vor.u32 1.1754944e-38, %v1284
        %v1286 = vsel %vm1283, %v1285, %v1281
        %v1287 = vrcp.pop %v1169
        %v1288 = vmul.f32 %v1169, %v1287
        %v1289 = vsub.f32 1.0, %v1288
        %v1290 = vmul.f32 %v1287, %v1289
        %v1291 = vadd.f32 %v1287, %v1290
        %vm1292 = vweird.f32 %v1169
        %vm1293 = vweird.f32 %v1287
        %vm1294 = vmor %vm1292, %vm1293
        %v1295 = vsel %vm1294, %v1287, %v1291
        %v1296 = vand.u32 2147483647, %v1169
        %vm1297 = vcmp.eq.f32.partialorder %v1296, 8.507059e+37
        %v1298 = vand.u32 %v1169, 2147483648
        %v1299 = vor.u32 1.1754944e-38, %v1298
        %v1300 = vsel %vm1297, %v1299, %v1295
        %v1301 = vrcp.pop %v1170
        %v1302 = vmul.f32 %v1170, %v1301
        %v1303 = vsub.f32 1.0, %v1302
        %v1304 = vmul.f32 %v1301, %v1303
        %v1305 = vadd.f32 %v1301, %v1304
        %vm1306 = vweird.f32 %v1170
        %vm1307 = vweird.f32 %v1301
        %vm1308 = vmor %vm1306, %vm1307
        %v1309 = vsel %vm1308, %v1301, %v1305
        %v1310 = vand.u32 2147483647, %v1170
        %vm1311 = vcmp.eq.f32.partialorder %v1310, 8.507059e+37
        %v1312 = vand.u32 %v1170, 2147483648
        %v1313 = vor.u32 1.1754944e-38, %v1312
        %v1314 = vsel %vm1311, %v1313, %v1309
        %v1315 = vmul.f32 %v1195, %v1216
        %v1316 = vmul.f32 %v1196, %v1230
        %v1317 = vmul.f32 %v1197, %v1244
        %v1318 = vmul.f32 %v1198, %v1258
        %v1319 = vmul.f32 %v1199, %v1272
        %v1320 = vmul.f32 %v1200, %v1286
        %v1321 = vmul.f32 %v1201, %v1300
        %v1322 = vmul.f32 %v1202, %v1314
        %1323 = vset.pattern.permute.xlu0 3
        %1324 = vperm.xlu0 %1323, %v202
        %v1325 = vpop.permute.xlu0 %1324
        %1327 = vset.pattern.permute.xlu0 3
        %1328 = vperm.xlu0 %1327, %v203
        %v1329 = vpop.permute.xlu0 %1328
        %v1331 = vadd.f32 %v1315, %v1325
        %v1332 = vadd.f32 %v1316, %v1325
        %v1333 = vadd.f32 %v1317, %v1325
        %v1334 = vadd.f32 %v1318, %v1325
        %v1335 = vadd.f32 %v1319, %v1329
        %v1336 = vadd.f32 %v1320, %v1329
        %v1337 = vadd.f32 %v1321, %v1329
        %v1338 = vadd.f32 %v1322, %v1329
        %1340 = vset.pattern.permute.xlu0 0
        %1341 = vperm.xlu0 %1340, %v207
        %v1342 = vpop.permute.xlu0 %1341
        %1345 = vset.pattern.permute.xlu0 0
        %1346 = vperm.xlu0 %1345, %v208
        %v1347 = vpop.permute.xlu0 %1346
        %1350 = vset.pattern.permute.xlu0 0
        %1351 = vperm.xlu0 %1350, %v209
        %v1352 = vpop.permute.xlu0 %1351
        %vm1354 = vcmask 130048
        %v1356 = vsel %vm1354, %v204, 0
        %v1359 = vsel %vm1354, %v205, 0
        %v1362 = vsel %vm1354, %v206, 0
        %1364 = vmatpush.msra.mxu0 0.0
        %1365 = vmatpush.msra.mxu0 0.0
        %1366 = vmatpush.msra.mxu0 0.0
        %1367 = vmatpush.msra.mxu0 0.0
        %1368 = vmatpush.msra.mxu0 0.0
        %1369 = vmatpush.msra.mxu0 0.0
        %1370 = vmatpush.msra.mxu0 0.0
        %1371 = vmatpush.msra.mxu0 0.0
        %1372 = vmatpush.msra.mxu0 0.0
        %1373 = vmatpush.msra.mxu0 0.0
        %1374 = vmatpush.msra.mxu0 0.0
        %1375 = vmatpush.msra.mxu0 0.0
        %1376 = vmatpush.msra.mxu0 0.0
        %1377 = vmatpush.msra.mxu0 0.0
        %1378 = vmatpush.msra.mxu0 %v1335
        %1379 = vmatpush.msra.mxu0 %v1331
        %1380 = vmatmul.f32.gmra.mxu0 %v1356
        %v1381 = vpop.f32.mrf.mxu0
        %v1382 = vadd.f32 %v1342, %v1381
        %1383 = vmatmul.f32.gmra.mxu0 %v1359
        %v1384 = vpop.f32.mrf.mxu0
        %v1385 = vadd.f32 %v1347, %v1384
        %1386 = vmatmul.f32.gmra.mxu0 %v1362
        %v1387 = vpop.f32.mrf.mxu0
        %v1388 = vadd.f32 %v1352, %v1387
        %1389 = vdwg.mxu0
        %1390 = vmatpush.msra.mxu0 0.0
        %1391 = vmatpush.msra.mxu0 0.0
        %1392 = vmatpush.msra.mxu0 0.0
        %1393 = vmatpush.msra.mxu0 0.0
        %1394 = vmatpush.msra.mxu0 0.0
        %1395 = vmatpush.msra.mxu0 0.0
        %1396 = vmatpush.msra.mxu0 0.0
        %1397 = vmatpush.msra.mxu0 0.0
        %1398 = vmatpush.msra.mxu0 0.0
        %1399 = vmatpush.msra.mxu0 0.0
        %1400 = vmatpush.msra.mxu0 0.0
        %1401 = vmatpush.msra.mxu0 0.0
        %1402 = vmatpush.msra.mxu0 0.0
        %1403 = vmatpush.msra.mxu0 0.0
        %1404 = vmatpush.msra.mxu0 %v1336
        %1405 = vmatpush.msra.mxu0 %v1332
        %1406 = vmatmul.f32.gmra.mxu0 %v1356
        %v1407 = vpop.f32.mrf.mxu0
        %v1408 = vadd.f32 %v1342, %v1407
        %1409 = vmatmul.f32.gmra.mxu0 %v1359
        %v1410 = vpop.f32.mrf.mxu0
        %v1411 = vadd.f32 %v1347, %v1410
        %1412 = vmatmul.f32.gmra.mxu0 %v1362
        %v1413 = vpop.f32.mrf.mxu0
        %v1414 = vadd.f32 %v1352, %v1413
        %1415 = vdwg.mxu0
        %1416 = vmatpush.msra.mxu0 0.0
        %1417 = vmatpush.msra.mxu0 0.0
        %1418 = vmatpush.msra.mxu0 0.0
        %1419 = vmatpush.msra.mxu0 0.0
        %1420 = vmatpush.msra.mxu0 0.0
        %1421 = vmatpush.msra.mxu0 0.0
        %1422 = vmatpush.msra.mxu0 0.0
        %1423 = vmatpush.msra.mxu0 0.0
        %1424 = vmatpush.msra.mxu0 0.0
        %1425 = vmatpush.msra.mxu0 0.0
        %1426 = vmatpush.msra.mxu0 0.0
        %1427 = vmatpush.msra.mxu0 0.0
        %1428 = vmatpush.msra.mxu0 0.0
        %1429 = vmatpush.msra.mxu0 0.0
        %1430 = vmatpush.msra.mxu0 %v1337
        %1431 = vmatpush.msra.mxu0 %v1333
        %1432 = vmatmul.f32.gmra.mxu0 %v1356
        %v1433 = vpop.f32.mrf.mxu0
        %v1434 = vadd.f32 %v1342, %v1433
        %1435 = vmatmul.f32.gmra.mxu0 %v1359
        %v1436 = vpop.f32.mrf.mxu0
        %v1437 = vadd.f32 %v1347, %v1436
        %1438 = vmatmul.f32.gmra.mxu0 %v1362
        %v1439 = vpop.f32.mrf.mxu0
        %v1440 = vadd.f32 %v1352, %v1439
        %1441 = vdwg.mxu0
        %1442 = vmatpush.msra.mxu0 0.0
        %1443 = vmatpush.msra.mxu0 0.0
        %1444 = vmatpush.msra.mxu0 0.0
        %1445 = vmatpush.msra.mxu0 0.0
        %1446 = vmatpush.msra.mxu0 0.0
        %1447 = vmatpush.msra.mxu0 0.0
        %1448 = vmatpush.msra.mxu0 0.0
        %1449 = vmatpush.msra.mxu0 0.0
        %1450 = vmatpush.msra.mxu0 0.0
        %1451 = vmatpush.msra.mxu0 0.0
        %1452 = vmatpush.msra.mxu0 0.0
        %1453 = vmatpush.msra.mxu0 0.0
        %1454 = vmatpush.msra.mxu0 0.0
        %1455 = vmatpush.msra.mxu0 0.0
        %1456 = vmatpush.msra.mxu0 %v1338
        %1457 = vmatpush.msra.mxu0 %v1334
        %1458 = vmatmul.f32.gmra.mxu0 %v1356
        %v1459 = vpop.f32.mrf.mxu0
        %v1460 = vadd.f32 %v1342, %v1459
        %1461 = vmatmul.f32.gmra.mxu0 %v1359
        %v1462 = vpop.f32.mrf.mxu0
        %v1463 = vadd.f32 %v1347, %v1462
        %1464 = vmatmul.f32.gmra.mxu0 %v1362
        %v1465 = vpop.f32.mrf.mxu0
        %v1466 = vadd.f32 %v1352, %v1465
        %1467 = vdwg.mxu0
        %v1468 = vxor.u32 %v1382, 2147483648
        %v1469 = vxor.u32 %v1408, 2147483648
        %v1470 = vxor.u32 %v1434, 2147483648
        %v1471 = vxor.u32 %v1460, 2147483648
        %v1472 = vxor.u32 %v1385, 2147483648
        %v1473 = vxor.u32 %v1411, 2147483648
        %v1474 = vxor.u32 %v1437, 2147483648
        %v1475 = vxor.u32 %v1463, 2147483648
        %v1476 = vxor.u32 %v1388, 2147483648
        %v1477 = vxor.u32 %v1414, 2147483648
        %v1478 = vxor.u32 %v1440, 2147483648
        %v1479 = vxor.u32 %v1466, 2147483648
        %v1480 = vmul.f32 %v1468, 1.442695
        %v1481 = vpow.pop %v1480
        %v1482 = vmul.f32 %v1469, 1.442695
        %v1483 = vpow.pop %v1482
        %v1484 = vmul.f32 %v1470, 1.442695
        %v1485 = vpow.pop %v1484
        %v1486 = vmul.f32 %v1471, 1.442695
        %v1487 = vpow.pop %v1486
        %v1488 = vmul.f32 %v1472, 1.442695
        %v1489 = vpow.pop %v1488
        %v1490 = vmul.f32 %v1473, 1.442695
        %v1491 = vpow.pop %v1490
        %v1492 = vmul.f32 %v1474, 1.442695
        %v1493 = vpow.pop %v1492
        %v1494 = vmul.f32 %v1475, 1.442695
        %v1495 = vpow.pop %v1494
        %v1496 = vmul.f32 %v1476, 1.442695
        %v1497 = vpow.pop %v1496
        %v1498 = vmul.f32 %v1477, 1.442695
        %v1499 = vpow.pop %v1498
        %v1500 = vmul.f32 %v1478, 1.442695
        %v1501 = vpow.pop %v1500
        %v1502 = vmul.f32 %v1479, 1.442695
        %v1503 = vpow.pop %v1502
        %v1504 = vadd.f32 %v1481, 1.0
        %v1505 = vadd.f32 %v1483, 1.0
        %v1506 = vadd.f32 %v1485, 1.0
        %v1507 = vadd.f32 %v1487, 1.0
        %v1508 = vadd.f32 %v1489, 1.0
        %v1509 = vadd.f32 %v1491, 1.0
        %v1510 = vadd.f32 %v1493, 1.0
        %v1511 = vadd.f32 %v1495, 1.0
        %v1512 = vadd.f32 %v1497, 1.0
        %v1513 = vadd.f32 %v1499, 1.0
        %v1514 = vadd.f32 %v1501, 1.0
        %v1515 = vadd.f32 %v1503, 1.0
        %v1516 = vrcp.pop %v1504
        %v1517 = vmul.f32 %v1504, %v1516
        %v1518 = vsub.f32 1.0, %v1517
        %v1519 = vmul.f32 %v1516, %v1518
        %v1520 = vadd.f32 %v1516, %v1519
        %vm1521 = vweird.f32 %v1504
        %vm1522 = vweird.f32 %v1516
        %vm1523 = vmor %vm1521, %vm1522
        %v1524 = vsel %vm1523, %v1516, %v1520
        %v1525 = vand.u32 2147483647, %v1504
        %vm1526 = vcmp.eq.f32.partialorder %v1525, 8.507059e+37
        %v1527 = vand.u32 %v1504, 2147483648
        %v1528 = vor.u32 1.1754944e-38, %v1527
        %v1529 = vsel %vm1526, %v1528, %v1524
        %v1530 = vmul.f32 1.0, %v1529
        %v1531 = vrcp.pop %v1505
        %v1532 = vmul.f32 %v1505, %v1531
        %v1533 = vsub.f32 1.0, %v1532
        %v1534 = vmul.f32 %v1531, %v1533
        %v1535 = vadd.f32 %v1531, %v1534
        %vm1536 = vweird.f32 %v1505
        %vm1537 = vweird.f32 %v1531
        %vm1538 = vmor %vm1536, %vm1537
        %v1539 = vsel %vm1538, %v1531, %v1535
        %v1540 = vand.u32 2147483647, %v1505
        %vm1541 = vcmp.eq.f32.partialorder %v1540, 8.507059e+37
        %v1542 = vand.u32 %v1505, 2147483648
        %v1543 = vor.u32 1.1754944e-38, %v1542
        %v1544 = vsel %vm1541, %v1543, %v1539
        %v1545 = vmul.f32 1.0, %v1544
        %v1546 = vrcp.pop %v1506
        %v1547 = vmul.f32 %v1506, %v1546
        %v1548 = vsub.f32 1.0, %v1547
        %v1549 = vmul.f32 %v1546, %v1548
        %v1550 = vadd.f32 %v1546, %v1549
        %vm1551 = vweird.f32 %v1506
        %vm1552 = vweird.f32 %v1546
        %vm1553 = vmor %vm1551, %vm1552
        %v1554 = vsel %vm1553, %v1546, %v1550
        %v1555 = vand.u32 2147483647, %v1506
        %vm1556 = vcmp.eq.f32.partialorder %v1555, 8.507059e+37
        %v1557 = vand.u32 %v1506, 2147483648
        %v1558 = vor.u32 1.1754944e-38, %v1557
        %v1559 = vsel %vm1556, %v1558, %v1554
        %v1560 = vmul.f32 1.0, %v1559
        %v1561 = vrcp.pop %v1507
        %v1562 = vmul.f32 %v1507, %v1561
        %v1563 = vsub.f32 1.0, %v1562
        %v1564 = vmul.f32 %v1561, %v1563
        %v1565 = vadd.f32 %v1561, %v1564
        %vm1566 = vweird.f32 %v1507
        %vm1567 = vweird.f32 %v1561
        %vm1568 = vmor %vm1566, %vm1567
        %v1569 = vsel %vm1568, %v1561, %v1565
        %v1570 = vand.u32 2147483647, %v1507
        %vm1571 = vcmp.eq.f32.partialorder %v1570, 8.507059e+37
        %v1572 = vand.u32 %v1507, 2147483648
        %v1573 = vor.u32 1.1754944e-38, %v1572
        %v1574 = vsel %vm1571, %v1573, %v1569
        %v1575 = vmul.f32 1.0, %v1574
        %v1576 = vrcp.pop %v1508
        %v1577 = vmul.f32 %v1508, %v1576
        %v1578 = vsub.f32 1.0, %v1577
        %v1579 = vmul.f32 %v1576, %v1578
        %v1580 = vadd.f32 %v1576, %v1579
        %vm1581 = vweird.f32 %v1508
        %vm1582 = vweird.f32 %v1576
        %vm1583 = vmor %vm1581, %vm1582
        %v1584 = vsel %vm1583, %v1576, %v1580
        %v1585 = vand.u32 2147483647, %v1508
        %vm1586 = vcmp.eq.f32.partialorder %v1585, 8.507059e+37
        %v1587 = vand.u32 %v1508, 2147483648
        %v1588 = vor.u32 1.1754944e-38, %v1587
        %v1589 = vsel %vm1586, %v1588, %v1584
        %v1590 = vmul.f32 1.0, %v1589
        %v1591 = vrcp.pop %v1509
        %v1592 = vmul.f32 %v1509, %v1591
        %v1593 = vsub.f32 1.0, %v1592
        %v1594 = vmul.f32 %v1591, %v1593
        %v1595 = vadd.f32 %v1591, %v1594
        %vm1596 = vweird.f32 %v1509
        %vm1597 = vweird.f32 %v1591
        %vm1598 = vmor %vm1596, %vm1597
        %v1599 = vsel %vm1598, %v1591, %v1595
        %v1600 = vand.u32 2147483647, %v1509
        %vm1601 = vcmp.eq.f32.partialorder %v1600, 8.507059e+37
        %v1602 = vand.u32 %v1509, 2147483648
        %v1603 = vor.u32 1.1754944e-38, %v1602
        %v1604 = vsel %vm1601, %v1603, %v1599
        %v1605 = vmul.f32 1.0, %v1604
        %v1606 = vrcp.pop %v1510
        %v1607 = vmul.f32 %v1510, %v1606
        %v1608 = vsub.f32 1.0, %v1607
        %v1609 = vmul.f32 %v1606, %v1608
        %v1610 = vadd.f32 %v1606, %v1609
        %vm1611 = vweird.f32 %v1510
        %vm1612 = vweird.f32 %v1606
        %vm1613 = vmor %vm1611, %vm1612
        %v1614 = vsel %vm1613, %v1606, %v1610
        %v1615 = vand.u32 2147483647, %v1510
        %vm1616 = vcmp.eq.f32.partialorder %v1615, 8.507059e+37
        %v1617 = vand.u32 %v1510, 2147483648
        %v1618 = vor.u32 1.1754944e-38, %v1617
        %v1619 = vsel %vm1616, %v1618, %v1614
        %v1620 = vmul.f32 1.0, %v1619
        %v1621 = vrcp.pop %v1511
        %v1622 = vmul.f32 %v1511, %v1621
        %v1623 = vsub.f32 1.0, %v1622
        %v1624 = vmul.f32 %v1621, %v1623
        %v1625 = vadd.f32 %v1621, %v1624
        %vm1626 = vweird.f32 %v1511
        %vm1627 = vweird.f32 %v1621
        %vm1628 = vmor %vm1626, %vm1627
        %v1629 = vsel %vm1628, %v1621, %v1625
        %v1630 = vand.u32 2147483647, %v1511
        %vm1631 = vcmp.eq.f32.partialorder %v1630, 8.507059e+37
        %v1632 = vand.u32 %v1511, 2147483648
        %v1633 = vor.u32 1.1754944e-38, %v1632
        %v1634 = vsel %vm1631, %v1633, %v1629
        %v1635 = vmul.f32 1.0, %v1634
        %v1636 = vrcp.pop %v1512
        %v1637 = vmul.f32 %v1512, %v1636
        %v1638 = vsub.f32 1.0, %v1637
        %v1639 = vmul.f32 %v1636, %v1638
        %v1640 = vadd.f32 %v1636, %v1639
        %vm1641 = vweird.f32 %v1512
        %vm1642 = vweird.f32 %v1636
        %vm1643 = vmor %vm1641, %vm1642
        %v1644 = vsel %vm1643, %v1636, %v1640
        %v1645 = vand.u32 2147483647, %v1512
        %vm1646 = vcmp.eq.f32.partialorder %v1645, 8.507059e+37
        %v1647 = vand.u32 %v1512, 2147483648
        %v1648 = vor.u32 1.1754944e-38, %v1647
        %v1649 = vsel %vm1646, %v1648, %v1644
        %v1650 = vmul.f32 1.0, %v1649
        %v1651 = vrcp.pop %v1513
        %v1652 = vmul.f32 %v1513, %v1651
        %v1653 = vsub.f32 1.0, %v1652
        %v1654 = vmul.f32 %v1651, %v1653
        %v1655 = vadd.f32 %v1651, %v1654
        %vm1656 = vweird.f32 %v1513
        %vm1657 = vweird.f32 %v1651
        %vm1658 = vmor %vm1656, %vm1657
        %v1659 = vsel %vm1658, %v1651, %v1655
        %v1660 = vand.u32 2147483647, %v1513
        %vm1661 = vcmp.eq.f32.partialorder %v1660, 8.507059e+37
        %v1662 = vand.u32 %v1513, 2147483648
        %v1663 = vor.u32 1.1754944e-38, %v1662
        %v1664 = vsel %vm1661, %v1663, %v1659
        %v1665 = vmul.f32 1.0, %v1664
        %v1666 = vrcp.pop %v1514
        %v1667 = vmul.f32 %v1514, %v1666
        %v1668 = vsub.f32 1.0, %v1667
        %v1669 = vmul.f32 %v1666, %v1668
        %v1670 = vadd.f32 %v1666, %v1669
        %vm1671 = vweird.f32 %v1514
        %vm1672 = vweird.f32 %v1666
        %vm1673 = vmor %vm1671, %vm1672
        %v1674 = vsel %vm1673, %v1666, %v1670
        %v1675 = vand.u32 2147483647, %v1514
        %vm1676 = vcmp.eq.f32.partialorder %v1675, 8.507059e+37
        %v1677 = vand.u32 %v1514, 2147483648
        %v1678 = vor.u32 1.1754944e-38, %v1677
        %v1679 = vsel %vm1676, %v1678, %v1674
        %v1680 = vmul.f32 1.0, %v1679
        %v1681 = vrcp.pop %v1515
        %v1682 = vmul.f32 %v1515, %v1681
        %v1683 = vsub.f32 1.0, %v1682
        %v1684 = vmul.f32 %v1681, %v1683
        %v1685 = vadd.f32 %v1681, %v1684
        %vm1686 = vweird.f32 %v1515
        %vm1687 = vweird.f32 %v1681
        %vm1688 = vmor %vm1686, %vm1687
        %v1689 = vsel %vm1688, %v1681, %v1685
        %v1690 = vand.u32 2147483647, %v1515
        %vm1691 = vcmp.eq.f32.partialorder %v1690, 8.507059e+37
        %v1692 = vand.u32 %v1515, 2147483648
        %v1693 = vor.u32 1.1754944e-38, %v1692
        %v1694 = vsel %vm1691, %v1693, %v1689
        %v1695 = vmul.f32 1.0, %v1694
        %1696 = vst [vmem:[%s180] sm:$0xff] %v1530
        %1697 = vst [vmem:[%s180 + $0x8] sm:$0xff] %v1545
        %1698 = vst [vmem:[%s180 + $0x10] sm:$0xff] %v1560
        %1699 = vst [vmem:[%s180 + $0x18] sm:$0xff] %v1575
        %1700 = vst [vmem:[%s180 + $0x20] sm:$0xff] %v1590
        %1701 = vst [vmem:[%s180 + $0x28] sm:$0xff] %v1605
        %1702 = vst [vmem:[%s180 + $0x30] sm:$0xff] %v1620
        %1703 = vst [vmem:[%s180 + $0x38] sm:$0xff] %v1635
        %1704 = vst [vmem:[%s180 + $0x40] sm:$0xf] %v1650
        %1705 = vst [vmem:[%s180 + $0x48] sm:$0xf] %v1665
        %1706 = vst [vmem:[%s180 + $0x50] sm:$0xf] %v1680
        %1707 = vst [vmem:[%s180 + $0x58] sm:$0xf] %v1695
        %s1708 = sand.u32 %s75, 1
        %s1709 = scalar_lea.sflag [#allocation4], %s1708
        %s1710 = sand.u32 %s75, 1
        %s1711 = smul.addr %s1710, 96
        %s1712 = scalar_lea.vmem [#allocation7], %s1711
        // Predicated region
        $region37: #{tpu_custom_call.1} parent=27 // pred_check
          %p1713 = pneg %p85
        $region38: #{tpu_custom_call.1} parent=27 // pred_check_branch
          %1715 = sbr.rel (%p1713) target = $region40
        $region39: #{tpu_custom_call.1} parent=27 // pred_region
          %s1716 = smul.u32 4, %s20
          %1718 = vsyncadd %s1709, 0
          %s1719 = smul.addr %s1716, 8
          %s1720 = scalar_lea.hbm %s2, %s1719
          %s1721 = sshll.u32 %s1712, 4
          %s1722 = int_to_ptr.vmem [resolvable:$true] %s1721
          %s1723 = sshll.u32 %s1720, 4
          %s1724 = int_to_ptr.hbm [resolvable:$true] %s1723
          %1729 = dma.vmem_to_hbm [thread:$0]  %s1722, 1536, %s1724, %s1709, 512, 1024, 32
        $region40: #{tpu_custom_call.1} parent=27 // pred_fallthru
          _
      $region28: #{tpu_custom_call.1} parent=5 // pred_fallthru
        _
      %p1730 = scmp.le.s32.totalorder 2, %s15
      // Predicated region
      $region41: #{tpu_custom_call.1} parent=5 // pred_check
        %p1731 = pneg %p1730
      $region42: #{tpu_custom_call.1} parent=5 // pred_check_branch
        %1733 = sbr.rel (%p1731) target = $region44
      $region43: #{tpu_custom_call.1} parent=5 // pred_region
        %s1734 = ssub.s32 %s15, 2
        // Predicated region
        $region45: #{tpu_custom_call.1} parent=43 // pred_check
          %p1735 = pneg %p91
        $region46: #{tpu_custom_call.1} parent=43 // pred_check_branch
          %1737 = sbr.rel (%p1735) target = $region48
        $region47: #{tpu_custom_call.1} parent=43 // pred_region
          %s1738 = sand.u32 %s76, 1
          %s1739 = scalar_lea.sflag [#allocation4], %s1738
          %s1740 = sand.u32 %s76, 1
          %s1741 = smul.addr %s1740, 96
          %s1742 = scalar_lea.vmem [#allocation7], %s1741
          %1744 = dma.done %s1739, 1536
        $region48: #{tpu_custom_call.1} parent=43 // pred_fallthru
          _
      $region44: #{tpu_custom_call.1} parent=5 // pred_fallthru
        _
    $region6: #{tpu_custom_call.1} parent=1 // loop_footer
      %s19 = sadd.s32 1, %s15
    $region7: #{tpu_custom_call.1} parent=1 // loop_footer_branch
      %14 = sbr.rel target = $region3
    $region8: #{tpu_custom_call.1} parent=1 // loop_exit
      _
    %1745 = vsyncpa [#allocation3], 1
    %s1746 = scalar_lea.sflag [#allocation3], 1
    %1747 = vsyncpa %s1746, 1
    %1748 = vsyncpa [#allocation6], 1
    %1749 = vsyncpa [#allocation4], 1
    %s1750 = scalar_lea.sflag [#allocation4], 1
    %1751 = vsyncpa %s1750, 1

</llo_original>
